<compile_context>
chip_gen: v7x
topology: tpu7x:2x2x1
jax: 0.10.0
libtpu: 0.0.40
codegen_flags: <defaults>
</compile_context>

<pallas_src>
import functools
import math

import jax
import jax.numpy as jnp
from jax.experimental import pallas as pl
from jax.experimental.pallas import tpu as pltpu

_NEG_INF = float("-inf")
_M_INIT = -1e30


# ----------------------------------------------------------------------------
# small helpers
# ----------------------------------------------------------------------------
def _round_up(a, b):
    return ((a + b - 1) // b) * b


def _choose_tile(n, target=1024):
    # rows per grid step; multiple of 128 (lane/sublane friendly for bf16/f32)
    return min(target, _round_up(max(n, 1), 128))


def _pad2d(a, rows, cols):
    r, c = a.shape
    return jnp.pad(a, ((0, rows - r), (0, cols - c)))


def _head_masks(num_heads, hd, dvp):
    col = jnp.arange(dvp)
    return [jnp.logical_and(col >= h * hd, col < (h + 1) * hd)
            .astype(jnp.float32)[None, :] for h in range(num_heads)]


def _compiler_params():
    return pltpu.CompilerParams(
        dimension_semantics=("arbitrary",),
        vmem_limit_bytes=48 * 1024 * 1024)


# ----------------------------------------------------------------------------
# in-kernel building blocks
# ----------------------------------------------------------------------------
def _layernorm_pad(x, w, b, inv_n, eps=1e-5):
    # LayerNorm over the TRUE feature count; padded columns of x/w/b are zero,
    # so sums over the padded width equal sums over the true width and padded
    # outputs stay exactly zero.
    s1 = jnp.sum(x, axis=-1, keepdims=True)
    s2 = jnp.sum(x * x, axis=-1, keepdims=True)
    mu = s1 * inv_n
    var = jnp.maximum(s2 * inv_n - mu * mu, 0.0)
    return (x - mu) * jax.lax.rsqrt(var + eps) * w + b


def _mha_epilogue(q, attn, wepi_ref, V, gmul, inv_dv, dvp):
    # out_proj + residual + ln0 + relu-FFN residual + ln1 + (optional) gate.
    # V rows 2..7 = [bo_a, ln0w, ln0b, bfo, ln1w, ln1b]
    f32, bf16 = jnp.float32, jnp.bfloat16
    wo = wepi_ref[0:dvp, :]
    wf = wepi_ref[dvp:2 * dvp, :]
    A = jnp.dot(attn.astype(bf16), wo, preferred_element_type=f32) + V[2:3]
    O = q + A
    O = _layernorm_pad(O, V[3:4], V[4:5], inv_dv)
    O = O + jnp.maximum(
        jnp.dot(O.astype(bf16), wf, preferred_element_type=f32) + V[5:6], 0.0)
    O = _layernorm_pad(O, V[6:7], V[7:8], inv_dv)
    return O * gmul


def _flash_step(i, tile, n_valid, kt, qstack_ref, wkv_ref, V, dim_K,
                m_sc, l_sc, acc_sc):
    # one online-softmax step of the "latent queries attend over streamed keys"
    # attention.  qstack is (num_heads*Lq, dvp), pre-masked and pre-scaled.
    f32, bf16 = jnp.float32, jnp.bfloat16
    wk = wkv_ref[0:dim_K, :]
    wv = wkv_ref[dim_K:2 * dim_K, :]
    k2 = jnp.dot(kt, wk, preferred_element_type=f32) + V[0:1]          # (T, dvp)
    v2 = jnp.dot(kt, wv, preferred_element_type=f32) + V[1:2]
    s = jax.lax.dot_general(qstack_ref[...], k2.astype(bf16),
                            (((1,), (1,)), ((), ())),
                            preferred_element_type=f32)                # (H*Lq, T)
    key_idx = jax.lax.broadcasted_iota(jnp.int32, s.shape, 1) + i * tile
    s = jnp.where(key_idx < n_valid, s, _NEG_INF)
    m_prev = m_sc[...]
    m_cur = jnp.maximum(m_prev, jnp.max(s, axis=-1, keepdims=True))
    alpha = jnp.exp(m_prev - m_cur)
    p = jnp.exp(s - m_cur)
    l_sc[...] = l_sc[...] * alpha + jnp.sum(p, axis=-1, keepdims=True)
    acc_sc[...] = acc_sc[...] * alpha + jnp.dot(
        p.astype(bf16), v2.astype(bf16), preferred_element_type=f32)
    m_sc[...] = m_cur


def _flash_finalize(num_heads, hd, Lq, dvp, inv_dv,
                    qres_ref, gmul_ref, wepi_ref, vecs_ref, m_sc, l_sc, acc_sc):
    f32 = jnp.float32
    V = vecs_ref[...]
    normed = acc_sc[...] * pl.reciprocal(l_sc[...], approx=True)       # (H*Lq, dvp)
    col = jax.lax.broadcasted_iota(jnp.int32, (1, dvp), 1)
    attn = jnp.zeros((Lq, dvp), f32)
    for h in range(num_heads):
        mask = jnp.logical_and(col >= h * hd, col < (h + 1) * hd).astype(f32)
        attn = attn + normed[h * Lq:(h + 1) * Lq, :] * mask
    return _mha_epilogue(qres_ref[...], attn, wepi_ref, V, gmul_ref[...],
                         inv_dv, dvp)


def _bwd_tile(num_heads, lk, dim_Q, dvp, inv_dv,
              xq_ref, wqg_ref, wiq_ref, kst_ref, vst_ref, wepi_ref, vecs_ref):
    # "every instance attends over the topk latents" for one streamed row tile.
    # kst/vst are per-head-masked stacks precomputed in the wrapper.
    f32, bf16 = jnp.float32, jnp.bfloat16
    V = vecs_ref[...]
    X = xq_ref[...]                                                    # (T, dim_Q) bf16
    wq = wqg_ref[0:dim_Q, :]
    wg = wqg_ref[dim_Q:2 * dim_Q, :]
    q = jnp.dot(X, wq, preferred_element_type=f32) + V[0:1]            # (T, dvp)
    q2s = jnp.dot(q.astype(bf16), wiq_ref[...],
                  preferred_element_type=f32) + V[1:2]                 # pre-scaled
    s = jax.lax.dot_general(q2s.astype(bf16), kst_ref[...],
                            (((1,), (1,)), ((), ())),
                            preferred_element_type=f32)                # (T, H*lk)
    # per-head softmax over each lk-column segment
    ps = []
    for h in range(num_heads):
        sh = s[:, h * lk:(h + 1) * lk]
        eh = jnp.exp(sh - jnp.max(sh, axis=-1, keepdims=True))
        ps.append(eh / jnp.sum(eh, axis=-1, keepdims=True))
    p = jnp.concatenate(ps, axis=-1) if num_heads > 1 else ps[0]
    attn = jnp.dot(p.astype(bf16), vst_ref[...], preferred_element_type=f32)
    g = jnp.dot(X, wg, preferred_element_type=f32) + V[8:9]
    gmul = g * jax.nn.sigmoid(g)                                       # SiLU gate
    return _mha_epilogue(q, attn, wepi_ref, V, gmul, inv_dv, dvp)


# ----------------------------------------------------------------------------
# Kernel 1: standalone forward (block 0): latent queries flash-attend over all
# streamed instances.  Grid over key tiles, "arbitrary" (reduction) semantics.
# ----------------------------------------------------------------------------
def _fwd_kernel(num_heads, hd, Lq, tile, dim_K, dvp, inv_dv,
                n_ref, k_ref, qstack_ref, qres_ref, gmul_ref, wkv_ref,
                wepi_ref, vecs_ref, o_ref, m_sc, l_sc, acc_sc):
    i = pl.program_id(0)

    @pl.when(i == 0)
    def _init():
        m_sc[...] = jnp.full(m_sc.shape, _M_INIT, jnp.float32)
        l_sc[...] = jnp.zeros(l_sc.shape, jnp.float32)
        acc_sc[...] = jnp.zeros(acc_sc.shape, jnp.float32)

    V = vecs_ref[...]
    _flash_step(i, tile, n_ref[0], k_ref[...], qstack_ref, wkv_ref, V, dim_K,
                m_sc, l_sc, acc_sc)

    @pl.when(i == pl.num_programs(0) - 1)
    def _fin():
        O = _flash_finalize(num_heads, hd, Lq, dvp, inv_dv,
                            qres_ref, gmul_ref, wepi_ref, vecs_ref,
                            m_sc, l_sc, acc_sc)
        o_ref[...] = O.astype(o_ref.dtype)


def fwd_attend(pf, Xb, n, tile, *, num_heads):
    """Xb: (n_pad, dim_K) bf16 streamed keys; returns latent output (Lq, dvp) f32."""
    n_pad, dim_K = Xb.shape
    Lq, dvp = pf['qres'].shape
    hd = pf['d_v'] // num_heads
    inv_dv = 1.0 / pf['d_v']
    HLq = num_heads * Lq
    grid = (n_pad // tile,)

    kernel = functools.partial(_fwd_kernel, num_heads, hd, Lq, tile, dim_K,
                               dvp, inv_dv)

    def res(a):
        return pl.BlockSpec(a.shape, lambda i, nv: (0, 0))

    return pl.pallas_call(
        kernel,
        out_shape=jax.ShapeDtypeStruct((Lq, dvp), jnp.float32),
        grid_spec=pltpu.PrefetchScalarGridSpec(
            num_scalar_prefetch=1,
            grid=grid,
            in_specs=[
                pl.BlockSpec((tile, dim_K), lambda i, nv: (i, 0)),
                res(pf['qstack']), res(pf['qres']), res(pf['gmul']),
                res(pf['wkv']), res(pf['wepi']), res(pf['vecs'])],
            out_specs=pl.BlockSpec((Lq, dvp), lambda i, nv: (0, 0)),
            scratch_shapes=[
                pltpu.VMEM((HLq, 1), jnp.float32),
                pltpu.VMEM((HLq, 1), jnp.float32),
                pltpu.VMEM((HLq, dvp), jnp.float32)]),
        compiler_params=_compiler_params(),
    )(jnp.array([n], jnp.int32), Xb, pf['qstack'], pf['qres'], pf['gmul'],
      pf['wkv'], pf['wepi'], pf['vecs'])


# ----------------------------------------------------------------------------
# Kernel 2: fused project_backward(block i) + project_forward(block i+1) /
# NLP pooling (+ classifier).  One pass over the streamed rows: the backward
# output tile is consumed in VMEM as the next forward's key tile.
# ----------------------------------------------------------------------------
def _fused_kernel(num_heads, lk, hd, Lq, tile, dim_Qb, dvp, inv_dv,
                  write_x, with_cls,
                  n_ref, xq_ref,
                  bwqg_ref, bwiq_ref, bkst_ref, bvst_ref, bwepi_ref, bvecs_ref,
                  fqstack_ref, fqres_ref, fgmul_ref, fwkv_ref, fwepi_ref,
                  fvecs_ref, *rest):
    rest = list(rest)
    wc_ref = bc_ref = xo_ref = None
    if with_cls:
        wc_ref = rest.pop(0)
        bc_ref = rest.pop(0)
    if write_x:
        xo_ref = rest.pop(0)
    fo_ref, m_sc, l_sc, acc_sc = rest

    i = pl.program_id(0)

    @pl.when(i == 0)
    def _init():
        m_sc[...] = jnp.full(m_sc.shape, _M_INIT, jnp.float32)
        l_sc[...] = jnp.zeros(l_sc.shape, jnp.float32)
        acc_sc[...] = jnp.zeros(acc_sc.shape, jnp.float32)

    # ---- backward stage: per-instance attention over the topk latents ----
    O = _bwd_tile(num_heads, lk, dim_Qb, dvp, inv_dv,
                  xq_ref, bwqg_ref, bwiq_ref, bkst_ref, bvst_ref, bwepi_ref,
                  bvecs_ref)
    Ob = O.astype(jnp.bfloat16)
    if write_x:
        xo_ref[...] = Ob

    # ---- forward stage of the next block / pooling: flash accumulation ----
    FV = fvecs_ref[...]
    _flash_step(i, tile, n_ref[0], Ob, fqstack_ref, fwkv_ref, FV, dvp,
                m_sc, l_sc, acc_sc)

    @pl.when(i == pl.num_programs(0) - 1)
    def _fin():
        O2 = _flash_finalize(num_heads, hd, Lq, dvp, inv_dv,
                             fqres_ref, fgmul_ref, fwepi_ref, fvecs_ref,
                             m_sc, l_sc, acc_sc)
        if with_cls:
            logits = jnp.dot(O2.astype(jnp.bfloat16), wc_ref[...],
                             preferred_element_type=jnp.float32) + bc_ref[...]
            fo_ref[...] = logits.astype(fo_ref.dtype)
        else:
            fo_ref[...] = O2.astype(fo_ref.dtype)


def fused_bwd_fwd(pb, kst, vst, pf, Xq, n, tile, *, num_heads, write_x,
                  classifier=None):
    """Xq: (n_pad, dim_Qb) bf16 streamed queries of the backward stage."""
    n_pad, dim_Qb = Xq.shape
    Lq, dvp = pf['qres'].shape
    lk = kst.shape[0] // num_heads
    hd = pf['d_v'] // num_heads
    inv_dv = 1.0 / pf['d_v']
    HLq = num_heads * Lq
    grid = (n_pad // tile,)
    with_cls = classifier is not None

    inputs = [Xq, pb['wqg'], pb['wiq'], kst, vst, pb['wepi'], pb['vecs'],
              pf['qstack'], pf['qres'], pf['gmul'], pf['wkv'], pf['wepi'],
              pf['vecs']]

    def res(a):
        return pl.BlockSpec(a.shape, lambda i, nv: (0, 0))

    in_specs = ([pl.BlockSpec((tile, dim_Qb), lambda i, nv: (i, 0))]
                + [res(a) for a in inputs[1:]])
    if with_cls:
        wc, bc = classifier
        inputs += [wc, bc]
        in_specs += [res(wc), res(bc)]
        fdim = wc.shape[1]
    else:
        fdim = dvp

    out_shapes, out_specs = [], []
    if write_x:
        out_shapes.append(jax.ShapeDtypeStruct((n_pad, dvp), jnp.bfloat16))
        out_specs.append(pl.BlockSpec((tile, dvp), lambda i, nv: (i, 0)))
    out_shapes.append(jax.ShapeDtypeStruct((Lq, fdim), jnp.float32))
    out_specs.append(pl.BlockSpec((Lq, fdim), lambda i, nv: (0, 0)))

    kernel = functools.partial(_fused_kernel, num_heads, lk, hd, Lq, tile,
                               dim_Qb, dvp, inv_dv, write_x, with_cls)
    return pl.pallas_call(
        kernel,
        out_shape=tuple(out_shapes),
        grid_spec=pltpu.PrefetchScalarGridSpec(
            num_scalar_prefetch=1,
            grid=grid,
            in_specs=in_specs,
            out_specs=tuple(out_specs),
            scratch_shapes=[
                pltpu.VMEM((HLq, 1), jnp.float32),
                pltpu.VMEM((HLq, 1), jnp.float32),
                pltpu.VMEM((HLq, dvp), jnp.float32)]),
        compiler_params=_compiler_params(),
    )(jnp.array([n], jnp.int32), *inputs)


# ----------------------------------------------------------------------------
# Parameter packing.  fc_k/fc_v are folded into the attention in-projections,
# the query side of the forward/pool MHAs (fixed latent queries) is fully
# precomputed, d_V is zero-padded to a multiple of 128, matmul weights bf16.
# ----------------------------------------------------------------------------
def pack_fwd_role(p, Q, gated, num_heads, dvp, key_rows):
    """MHA used with fixed (parameter) queries Q and streamed keys."""
    f32, bf16 = jnp.float32, jnp.bfloat16
    d_v = p['wq'].shape[1]
    hd = d_v // num_heads
    scale = 1.0 / math.sqrt(hd)
    masks = _head_masks(num_heads, hd, dvp)

    # query-side precompute (tiny: topk rows) — hoisted out of the kernel
    q = Q @ p['wq'] + p['bq']
    q2 = (q @ p['wiq'] + p['biq']) * scale
    q2p = _pad2d(q2, q2.shape[0], dvp)
    qstack = jnp.concatenate([q2p * m for m in masks], axis=0)
    if gated:
        gmul = jax.nn.silu(Q @ p['wg'] + p['bg'])
    else:
        gmul = jnp.ones_like(q)

    # key side: fold fc_k / fc_v into the attention in-projections
    wk_eff = p['wk'] @ p['wik']
    bk_eff = p['bk'] @ p['wik'] + p['bik']
    wv_eff = p['wv'] @ p['wiv']
    bv_eff = p['bv'] @ p['wiv'] + p['biv']
    wkv = jnp.concatenate([_pad2d(wk_eff, key_rows, dvp),
                           _pad2d(wv_eff, key_rows, dvp)], axis=0)
    wepi = jnp.concatenate([_pad2d(p['wo_a'], dvp, dvp),
                            _pad2d(p['wfo'], dvp, dvp)], axis=0)
    vecs = jnp.concatenate([
        _pad2d(bk_eff, 1, dvp), _pad2d(bv_eff, 1, dvp),
        _pad2d(p['bo_a'], 1, dvp),
        _pad2d(p['ln0w'], 1, dvp), _pad2d(p['ln0b'], 1, dvp),
        _pad2d(p['bfo'], 1, dvp),
        _pad2d(p['ln1w'], 1, dvp), _pad2d(p['ln1b'], 1, dvp)], axis=0)
    return dict(
        qstack=qstack.astype(bf16),
        qres=_pad2d(q, q.shape[0], dvp).astype(f32),
        gmul=_pad2d(gmul, gmul.shape[0], dvp).astype(f32),
        wkv=wkv.astype(bf16), wepi=wepi.astype(bf16), vecs=vecs.astype(f32),
        d_v=d_v)


def pack_bwd_role(p, num_heads, dvp, q_rows):
    """MHA used with streamed queries and tiny fixed keys (computed per call)."""
    f32, bf16 = jnp.float32, jnp.bfloat16
    d_v = p['wq'].shape[1]
    hd = d_v // num_heads
    scale = 1.0 / math.sqrt(hd)
    wqg = jnp.concatenate([_pad2d(p['wq'], q_rows, dvp),
                           _pad2d(p['wg'], q_rows, dvp)], axis=0)
    wiq = _pad2d(p['wiq'] * scale, dvp, dvp)           # scale folded into in_proj_q
    wepi = jnp.concatenate([_pad2d(p['wo_a'], dvp, dvp),
                            _pad2d(p['wfo'], dvp, dvp)], axis=0)
    vecs = jnp.concatenate([
        _pad2d(p['bq'], 1, dvp), _pad2d(p['biq'] * scale, 1, dvp),
        _pad2d(p['bo_a'], 1, dvp),
        _pad2d(p['ln0w'], 1, dvp), _pad2d(p['ln0b'], 1, dvp),
        _pad2d(p['bfo'], 1, dvp),
        _pad2d(p['ln1w'], 1, dvp), _pad2d(p['ln1b'], 1, dvp),
        _pad2d(p['bg'], 1, dvp)], axis=0)
    # key-side folded weights (used by the wrapper on the tiny latent keys)
    wk_eff = p['wk'] @ p['wik']
    bk_eff = p['bk'] @ p['wik'] + p['bik']
    wv_eff = p['wv'] @ p['wiv']
    bv_eff = p['bv'] @ p['wiv'] + p['biv']
    return dict(
        wqg=wqg.astype(bf16), wiq=wiq.astype(bf16), wepi=wepi.astype(bf16),
        vecs=vecs.astype(f32),
        wk_eff=_pad2d(wk_eff, dvp, dvp).astype(f32),
        bk_eff=_pad2d(bk_eff, 1, dvp).astype(f32),
        wv_eff=_pad2d(wv_eff, dvp, dvp).astype(f32),
        bv_eff=_pad2d(bv_eff, 1, dvp).astype(f32),
        d_v=d_v)


def _bwd_key_constants(pb, H, num_heads, dvp):
    """Per-call, tiny: k2/v2 of the topk latents, stacked per head (masked)."""
    hd = pb['d_v'] // num_heads
    masks = _head_masks(num_heads, hd, dvp)
    k2 = H @ pb['wk_eff'] + pb['bk_eff']
    v2 = H @ pb['wv_eff'] + pb['bv_eff']
    kst = jnp.concatenate([k2 * m for m in masks], axis=0).astype(jnp.bfloat16)
    vst = jnp.concatenate([v2 * m for m in masks], axis=0).astype(jnp.bfloat16)
    return kst, vst


def pack_ilra_params(raw, num_heads, feat_dim):
    hidden = raw['S'].shape[1]
    n_classes = raw['wc'].shape[1]
    dvp = _round_up(hidden, 128)
    blocks = raw['gab_blocks']
    L = len(blocks)

    fwd0 = pack_fwd_role(blocks[0]['fwd'], blocks[0]['latent'], True,
                         num_heads, dvp, key_rows=feat_dim)

    c_pad = _round_up(n_classes, 128)                  # lane-dense classifier out
    wc_pad = _pad2d(raw['wc'], dvp, c_pad).astype(jnp.bfloat16)
    bc_pad = _pad2d(raw['bc'], 1, c_pad).astype(jnp.float32)

    stages = []
    for i in range(L):
        q_rows = feat_dim if i == 0 else dvp
        bwd = pack_bwd_role(blocks[i]['bwd'], num_heads, dvp, q_rows)
        if i < L - 1:
            fwd = pack_fwd_role(blocks[i + 1]['fwd'], blocks[i + 1]['latent'],
                                True, num_heads, dvp, key_rows=dvp)
            stages.append(dict(bwd=bwd, fwd=fwd, cls=None, write_x=True))
        else:
            fwd = pack_fwd_role(raw['pool'], raw['S'], False, num_heads, dvp,
                                key_rows=dvp)
            stages.append(dict(bwd=bwd, fwd=fwd, cls=(wc_pad, bc_pad),
                               write_x=False))
    return dict(fwd0=fwd0, stages=stages, dvp=dvp, num_heads=num_heads,
                n_classes=n_classes)


# ----------------------------------------------------------------------------
# ILRA forward (glue around the Pallas kernels)
# ----------------------------------------------------------------------------
def ilra_forward(packed, x, tile=None):
    num_heads = packed['num_heads']
    n = x.shape[0]
    tile = tile if tile is not None else _choose_tile(n)
    n_pad = _round_up(n, tile)
    Xb = jnp.pad(x.astype(jnp.bfloat16), ((0, n_pad - n), (0, 0)))

    # block 0 project_forward: latent queries flash-attend over all instances
    H = fwd_attend(packed['fwd0'], Xb, n, tile, num_heads=num_heads)

    logits_pad = None
    for st in packed['stages']:
        kst, vst = _bwd_key_constants(st['bwd'], H, num_heads, packed['dvp'])
        outs = fused_bwd_fwd(st['bwd'], kst, vst, st['fwd'], Xb, n, tile,
                             num_heads=num_heads, write_x=st['write_x'],
                             classifier=st['cls'])
        if st['write_x']:
            Xb, H = outs
        else:
            logits_pad = outs[0] if isinstance(outs, (tuple, list)) else outs
    return logits_pad[:, :packed['n_classes']]


# ----------------------------------------------------------------------------
# Pure-JAX f32 reference (independent implementation) for the correctness check
# ----------------------------------------------------------------------------
def _layernorm_ref(x, w, b, eps=1e-5):
    mu = jnp.mean(x, axis=-1, keepdims=True)
    var = jnp.mean((x - mu) ** 2, axis=-1, keepdims=True)
    return (x - mu) * jax.lax.rsqrt(var + eps) * w + b


def mha_ref(p, Q, K, num_heads, gated):
    q = Q @ p['wq'] + p['bq']
    k = K @ p['wk'] + p['bk']
    v = K @ p['wv'] + p['bv']
    q2 = q @ p['wiq'] + p['biq']
    k2 = k @ p['wik'] + p['bik']
    v2 = v @ p['wiv'] + p['biv']
    Lq, dV = q2.shape
    Lk = k2.shape[0]
    hd = dV // num_heads
    qh = q2.reshape(Lq, num_heads, hd).transpose(1, 0, 2)
    kh = k2.reshape(Lk, num_heads, hd).transpose(1, 0, 2)
    vh = v2.reshape(Lk, num_heads, hd).transpose(1, 0, 2)
    s = jnp.einsum('hqd,hkd->hqk', qh, kh) / math.sqrt(hd)
    pa = jax.nn.softmax(s, axis=-1)
    a = jnp.einsum('hqk,hkd->hqd', pa, vh).transpose(1, 0, 2).reshape(Lq, dV)
    A = a @ p['wo_a'] + p['bo_a']
    O = q + A
    O = _layernorm_ref(O, p['ln0w'], p['ln0b'])
    O = O + jax.nn.relu(O @ p['wfo'] + p['bfo'])
    O = _layernorm_ref(O, p['ln1w'], p['ln1b'])
    if gated:
        O = O * jax.nn.silu(Q @ p['wg'] + p['bg'])
    return O


def ilra_ref(params, x, num_heads):
    X = x
    for blk in params['gab_blocks']:
        H = mha_ref(blk['fwd'], blk['latent'], X, num_heads, True)
        X = mha_ref(blk['bwd'], X, H, num_heads, True)
    feat = mha_ref(params['pool'], params['S'], X, num_heads, False)
    return feat @ params['wc'] + params['bc']


# ----------------------------------------------------------------------------
# deterministic synthetic parameters (mirrors the module's shapes)
# ----------------------------------------------------------------------------
def _xavier(key, d_in, d_out):
    std = math.sqrt(2.0 / (d_in + d_out))
    return std * jax.random.normal(key, (d_in, d_out), dtype=jnp.float32)


def _bias(key, d):
    return 0.01 * jax.random.normal(key, (1, d), dtype=jnp.float32)


def init_mha_params(key, dim_Q, dim_K, dim_V, gated):
    ks = jax.random.split(key, 18)
    p = dict(
        wq=_xavier(ks[0], dim_Q, dim_V), bq=_bias(ks[1], dim_V),
        wk=_xavier(ks[2], dim_K, dim_V), bk=_bias(ks[3], dim_V),
        wv=_xavier(ks[4], dim_K, dim_V), bv=_bias(ks[5], dim_V),
        wiq=_xavier(ks[6], dim_V, dim_V), biq=_bias(ks[7], dim_V),
        wik=_xavier(ks[8], dim_V, dim_V), bik=_bias(ks[9], dim_V),
        wiv=_xavier(ks[10], dim_V, dim_V), biv=_bias(ks[11], dim_V),
        wo_a=_xavier(ks[12], dim_V, dim_V), bo_a=_bias(ks[13], dim_V),
        ln0w=jnp.ones((1, dim_V), jnp.float32),
        ln0b=jnp.zeros((1, dim_V), jnp.float32),
        wfo=_xavier(ks[14], dim_V, dim_V), bfo=_bias(ks[15], dim_V),
        ln1w=jnp.ones((1, dim_V), jnp.float32),
        ln1b=jnp.zeros((1, dim_V), jnp.float32),
    )
    if gated:
        p['wg'] = _xavier(ks[16], dim_Q, dim_V)
        p['bg'] = _bias(ks[17], dim_V)
    return p


def init_ilra_params(key, num_layers, feat_dim, hidden, n_classes, topk):
    keys = jax.random.split(key, num_layers * 3 + 4)
    ki = 0
    gab_blocks = []
    for idx in range(num_layers):
        dim_in = feat_dim if idx == 0 else hidden
        gab_blocks.append(dict(
            latent=_xavier(keys[ki], topk, hidden),
            fwd=init_mha_params(keys[ki + 1], hidden, dim_in, hidden, True),
            bwd=init_mha_params(keys[ki + 2], dim_in, hidden, hidden, True),
        ))
        ki += 3
    S = _xavier(keys[ki], topk, hidden); ki += 1
    pool = init_mha_params(keys[ki], hidden, hidden, hidden, False); ki += 1
    wc = _xavier(keys[ki], hidden, n_classes); ki += 1
    bc = _bias(keys[ki], n_classes)
    return dict(gab_blocks=gab_blocks, S=S, pool=pool, wc=wc, bc=bc)


# ----------------------------------------------------------------------------
if __name__ == "__main__":
    # small shapes consistent with ILRA: N instances x feat_dim features.
    # tile=128 forces a multi-tile grid so the streamed/online-softmax path and
    # the padded-key masking are exercised.
    N, feat_dim, hidden, num_heads = 300, 64, 32, 4
    n_classes, num_layers, topk = 2, 2, 2

    key = jax.random.PRNGKey(0)
    k_params, k_x = jax.random.split(key)
    raw = init_ilra_params(k_params, num_layers, feat_dim, hidden, n_classes, topk)
    packed = pack_ilra_params(raw, num_heads, feat_dim)
    x = jax.random.normal(k_x, (N, feat_dim), dtype=jnp.float32)

    logits = ilra_forward(packed, x, tile=128)
    logits = jax.block_until_ready(logits)

    ref = ilra_ref(raw, x, num_heads)
    assert logits.shape == (topk, n_classes), logits.shape
    assert bool(jnp.all(jnp.isfinite(logits))), logits
    # bf16 MXU operands + folded projections + approx reciprocal -> loose tolerance
    err = float(jnp.max(jnp.abs(logits - ref)))
    scale = float(jnp.max(jnp.abs(ref))) + 1e-6
    assert err <= 0.05 + 0.1 * scale, (logits, ref, err)
    print("KERNEL_OK")
</pallas_src>

<mosaic_0001>
module attributes {stable_mosaic.version = 11 : i64} {
  func.func @_fwd_kernel(%arg0: i32, %arg1: memref<1xi32, #tpu.memory_space<smem>>, %arg2: memref<128x64xbf16, #tpu.memory_space<vmem>>, %arg3: memref<8x128xbf16, #tpu.memory_space<vmem>>, %arg4: memref<2x128xf32, #tpu.memory_space<vmem>>, %arg5: memref<2x128xf32, #tpu.memory_space<vmem>>, %arg6: memref<128x128xbf16, #tpu.memory_space<vmem>>, %arg7: memref<256x128xbf16, #tpu.memory_space<vmem>>, %arg8: memref<8x128xf32, #tpu.memory_space<vmem>>, %arg9: memref<2x128xf32, #tpu.memory_space<vmem>>, %arg10: memref<8x1xf32, #tpu.memory_space<vmem>>, %arg11: memref<8x1xf32, #tpu.memory_space<vmem>>, %arg12: memref<8x128xf32, #tpu.memory_space<vmem>>) attributes {dimension_semantics = [#tpu.dimension_semantics<arbitrary>], iteration_bounds = array<i64: 3>, scalar_prefetch = 1 : i64, scratch_operands = 3 : i64, tpu.core_type = #tpu.core_type<tc>, window_params = [{transform_indices = @transform_0, window_bounds = array<i64: 128, 64>}, {pipeline_mode = #tpu.pipeline_mode<synchronous>, transform_indices = @transform_1, window_bounds = array<i64: 8, 128>}, {pipeline_mode = #tpu.pipeline_mode<synchronous>, transform_indices = @transform_2, window_bounds = array<i64: 2, 128>}, {pipeline_mode = #tpu.pipeline_mode<synchronous>, transform_indices = @transform_3, window_bounds = array<i64: 2, 128>}, {pipeline_mode = #tpu.pipeline_mode<synchronous>, transform_indices = @transform_4, window_bounds = array<i64: 128, 128>}, {pipeline_mode = #tpu.pipeline_mode<synchronous>, transform_indices = @transform_5, window_bounds = array<i64: 256, 128>}, {pipeline_mode = #tpu.pipeline_mode<synchronous>, transform_indices = @transform_6, window_bounds = array<i64: 8, 128>}, {pipeline_mode = #tpu.pipeline_mode<synchronous>, transform_indices = @transform_7, window_bounds = array<i64: 2, 128>}]} {
    %c0_i32 = arith.constant 0 : i32
    %0 = arith.cmpi eq, %arg0, %c0_i32 : i32
    %1 = arith.extui %0 : i1 to i32
    %c0_i32_0 = arith.constant 0 : i32
    %2 = arith.cmpi ne, %1, %c0_i32_0 : i32
    scf.if %2 {
      %cst_29 = arith.constant -1.000000e+30 : f32
      %54 = vector.broadcast %cst_29 : f32 to vector<8x1xf32>
      %c0_30 = arith.constant 0 : index
      %c0_31 = arith.constant 0 : index
      %55 = vector.load %arg10[%c0_30, %c0_31] : memref<8x1xf32, #tpu.memory_space<vmem>>, vector<8x1xf32>
      tpu.vector_store %arg10[%c0_30, %c0_31], %54 {strides = array<i32>} : memref<8x1xf32, #tpu.memory_space<vmem>>, vector<8x1xf32>,
      %cst_32 = arith.constant 0.000000e+00 : f32
      %56 = vector.broadcast %cst_32 : f32 to vector<8x1xf32>
      %c0_33 = arith.constant 0 : index
      %c0_34 = arith.constant 0 : index
      %57 = vector.load %arg11[%c0_33, %c0_34] : memref<8x1xf32, #tpu.memory_space<vmem>>, vector<8x1xf32>
      tpu.vector_store %arg11[%c0_33, %c0_34], %56 {strides = array<i32>} : memref<8x1xf32, #tpu.memory_space<vmem>>, vector<8x1xf32>,
      %cst_35 = arith.constant 0.000000e+00 : f32
      %58 = vector.broadcast %cst_35 : f32 to vector<8x128xf32>
      %c0_36 = arith.constant 0 : index
      %c0_37 = arith.constant 0 : index
      %59 = vector.load %arg12[%c0_36, %c0_37] : memref<8x128xf32, #tpu.memory_space<vmem>>, vector<8x128xf32>
      tpu.vector_store %arg12[%c0_36, %c0_37], %58 {strides = array<i32>} : memref<8x128xf32, #tpu.memory_space<vmem>>, vector<8x128xf32>,
    } else {
    }
    %c0 = arith.constant 0 : index
    %c0_1 = arith.constant 0 : index
    %3 = vector.load %arg8[%c0, %c0_1] : memref<8x128xf32, #tpu.memory_space<vmem>>, vector<8x128xf32>
    %c0_2 = arith.constant 0 : index
    %4 = memref.load %arg1[%c0_2] : memref<1xi32, #tpu.memory_space<smem>>
    %c0_3 = arith.constant 0 : index
    %c0_4 = arith.constant 0 : index
    %5 = vector.load %arg2[%c0_3, %c0_4] : memref<128x64xbf16, #tpu.memory_space<vmem>>, vector<128x64xbf16>
    %c0_5 = arith.constant 0 : index
    %c0_6 = arith.constant 0 : index
    %6 = vector.load %arg6[%c0_5, %c0_6] : memref<128x128xbf16, #tpu.memory_space<vmem>>, vector<64x128xbf16>
    %c64 = arith.constant 64 : index
    %c0_7 = arith.constant 0 : index
    %7 = vector.load %arg6[%c64, %c0_7] : memref<128x128xbf16, #tpu.memory_space<vmem>>, vector<64x128xbf16>
    %cst = arith.constant dense<0.000000e+00> : vector<128x128xf32>
    %8 = tpu.matmul %5, %6, %cst {dimension_numbers = #tpu.dot_dimension_numbers<[1], [0], [0], [1], [0, 0, 1, 1], [], []>} : vector<128x64xbf16>, vector<64x128xbf16>, vector<128x128xf32> -> vector<128x128xf32>
    %9 = vector.extract_strided_slice %3 {offsets = [0, 0], sizes = [1, 128], strides = [1, 1]} : vector<8x128xf32> to vector<1x128xf32>
    %10 = vector.broadcast %9 : vector<1x128xf32> to vector<128x128xf32>
    %11 = arith.addf %8, %10 : vector<128x128xf32>
    %cst_8 = arith.constant dense<0.000000e+00> : vector<128x128xf32>
    %12 = tpu.matmul %5, %7, %cst_8 {dimension_numbers = #tpu.dot_dimension_numbers<[1], [0], [0], [1], [0, 0, 1, 1], [], []>} : vector<128x64xbf16>, vector<64x128xbf16>, vector<128x128xf32> -> vector<128x128xf32>
    %13 = vector.extract_strided_slice %3 {offsets = [1, 0], sizes = [1, 128], strides = [1, 1]} : vector<8x128xf32> to vector<1x128xf32>
    %14 = vector.broadcast %13 : vector<1x128xf32> to vector<128x128xf32>
    %15 = arith.addf %12, %14 : vector<128x128xf32>
    %c0_9 = arith.constant 0 : index
    %c0_10 = arith.constant 0 : index
    %16 = vector.load %arg3[%c0_9, %c0_10] : memref<8x128xbf16, #tpu.memory_space<vmem>>, vector<8x128xbf16>
    %17 = arith.truncf %11 : vector<128x128xf32> to vector<128x128xbf16>
    %cst_11 = arith.constant dense<0.000000e+00> : vector<8x128xf32>
    %18 = tpu.matmul %16, %17, %cst_11 {dimension_numbers = #tpu.dot_dimension_numbers<[1], [1], [0], [0], [0, 0, 1, 0], [], []>} : vector<8x128xbf16>, vector<128x128xbf16>, vector<8x128xf32> -> vector<8x128xf32>
    %19 = tpu.iota {dimensions = array<i32: 1>} : vector<8x128xi32>
    %c128_i32 = arith.constant 128 : i32
    %20 = arith.muli %arg0, %c128_i32 : i32
    %21 = vector.broadcast %20 : i32 to vector<8x128xi32>
    %22 = arith.addi %19, %21 : vector<8x128xi32>
    %23 = vector.broadcast %4 : i32 to vector<8x128xi32>
    %24 = arith.cmpi slt, %22, %23 : vector<8x128xi32>
    %cst_12 = arith.constant 0xFF800000 : f32
    %25 = vector.broadcast %cst_12 : f32 to vector<8x128xf32>
    %26 = arith.select %24, %18, %25 : vector<8x128xi1>, vector<8x128xf32>
    %c0_13 = arith.constant 0 : index
    %c0_14 = arith.constant 0 : index
    %27 = vector.load %arg10[%c0_13, %c0_14] : memref<8x1xf32, #tpu.memory_space<vmem>>, vector<8x1xf32>
    %cst_15 = arith.constant dense<0xFF800000> : vector<8xf32>
    %28 = vector.multi_reduction <maximumf>, %26, %cst_15 [1] : vector<8x128xf32> to vector<8xf32>
    %29 = vector.shape_cast %28 : vector<8xf32> to vector<8x1xf32>
    %30 = arith.maximumf %27, %29 : vector<8x1xf32>
    %31 = arith.subf %27, %30 : vector<8x1xf32>
    %32 = math.exp %31 : vector<8x1xf32>
    %33 = vector.broadcast %30 : vector<8x1xf32> to vector<8x128xf32>
    %34 = arith.subf %26, %33 : vector<8x128xf32>
    %35 = math.exp %34 : vector<8x128xf32>
    %c0_16 = arith.constant 0 : index
    %c0_17 = arith.constant 0 : index
    %36 = vector.load %arg11[%c0_16, %c0_17] : memref<8x1xf32, #tpu.memory_space<vmem>>, vector<8x1xf32>
    %37 = arith.mulf %36, %32 : vector<8x1xf32>
    %cst_18 = arith.constant dense<0.000000e+00> : vector<8xf32>
    %38 = vector.multi_reduction <add>, %35, %cst_18 [1] : vector<8x128xf32> to vector<8xf32>
    %39 = vector.shape_cast %38 : vector<8xf32> to vector<8x1xf32>
    %40 = arith.addf %37, %39 : vector<8x1xf32>
    %c0_19 = arith.constant 0 : index
    %c0_20 = arith.constant 0 : index
    %41 = vector.load %arg11[%c0_19, %c0_20] : memref<8x1xf32, #tpu.memory_space<vmem>>, vector<8x1xf32>
    tpu.vector_store %arg11[%c0_19, %c0_20], %40 {strides = array<i32>} : memref<8x1xf32, #tpu.memory_space<vmem>>, vector<8x1xf32>,
    %c0_21 = arith.constant 0 : index
    %c0_22 = arith.constant 0 : index
    %42 = vector.load %arg12[%c0_21, %c0_22] : memref<8x128xf32, #tpu.memory_space<vmem>>, vector<8x128xf32>
    %43 = vector.broadcast %32 : vector<8x1xf32> to vector<8x128xf32>
    %44 = arith.mulf %42, %43 : vector<8x128xf32>
    %45 = arith.truncf %35 : vector<8x128xf32> to vector<8x128xbf16>
    %46 = arith.truncf %15 : vector<128x128xf32> to vector<128x128xbf16>
    %cst_23 = arith.constant dense<0.000000e+00> : vector<8x128xf32>
    %47 = tpu.matmul %45, %46, %cst_23 {dimension_numbers = #tpu.dot_dimension_numbers<[1], [0], [0], [1], [0, 0, 1, 1], [], []>} : vector<8x128xbf16>, vector<128x128xbf16>, vector<8x128xf32> -> vector<8x128xf32>
    %48 = arith.addf %44, %47 : vector<8x128xf32>
    %c0_24 = arith.constant 0 : index
    %c0_25 = arith.constant 0 : index
    %49 = vector.load %arg12[%c0_24, %c0_25] : memref<8x128xf32, #tpu.memory_space<vmem>>, vector<8x128xf32>
    tpu.vector_store %arg12[%c0_24, %c0_25], %48 {strides = array<i32>} : memref<8x128xf32, #tpu.memory_space<vmem>>, vector<8x128xf32>,
    %c0_26 = arith.constant 0 : index
    %c0_27 = arith.constant 0 : index
    %50 = vector.load %arg10[%c0_26, %c0_27] : memref<8x1xf32, #tpu.memory_space<vmem>>, vector<8x1xf32>
    tpu.vector_store %arg10[%c0_26, %c0_27], %30 {strides = array<i32>} : memref<8x1xf32, #tpu.memory_space<vmem>>, vector<8x1xf32>,
    %c2_i32 = arith.constant 2 : i32
    %51 = arith.cmpi eq, %arg0, %c2_i32 : i32
    %52 = arith.extui %51 : i1 to i32
    %c0_i32_28 = arith.constant 0 : i32
    %53 = arith.cmpi ne, %52, %c0_i32_28 : i32
    scf.if %53 {
      %c0_29 = arith.constant 0 : index
      %c0_30 = arith.constant 0 : index
      %54 = vector.load %arg8[%c0_29, %c0_30] : memref<8x128xf32, #tpu.memory_space<vmem>>, vector<8x128xf32>
      %c0_31 = arith.constant 0 : index
      %c0_32 = arith.constant 0 : index
      %55 = vector.load %arg12[%c0_31, %c0_32] : memref<8x128xf32, #tpu.memory_space<vmem>>, vector<8x128xf32>
      %c0_33 = arith.constant 0 : index
      %c0_34 = arith.constant 0 : index
      %56 = vector.load %arg11[%c0_33, %c0_34] : memref<8x1xf32, #tpu.memory_space<vmem>>, vector<8x1xf32>
      %57 = tpu.reciprocal %56 {approx = true} : vector<8x1xf32> -> vector<8x1xf32>
      %58 = vector.broadcast %57 : vector<8x1xf32> to vector<8x128xf32>
      %59 = arith.mulf %55, %58 : vector<8x128xf32>
      %60 = tpu.iota {dimensions = array<i32: 1>} : vector<1x128xi32>
      %cst_35 = arith.constant 0.000000e+00 : f32
      %61 = vector.broadcast %cst_35 : f32 to vector<2x128xf32>
      %c0_i32_36 = arith.constant 0 : i32
      %62 = vector.broadcast %c0_i32_36 : i32 to vector<1x128xi32>
      %63 = arith.cmpi sge, %60, %62 : vector<1x128xi32>
      %c8_i32 = arith.constant 8 : i32
      %64 = vector.broadcast %c8_i32 : i32 to vector<1x128xi32>
      %65 = arith.cmpi slt, %60, %64 : vector<1x128xi32>
      %66 = arith.andi %63, %65 : vector<1x128xi1>
      %67 = arith.extui %66 : vector<1x128xi1> to vector<1x128xi32>
      %68 = arith.sitofp %67 : vector<1x128xi32> to vector<1x128xf32>
      %69 = vector.extract_strided_slice %59 {offsets = [0, 0], sizes = [2, 128], strides = [1, 1]} : vector<8x128xf32> to vector<2x128xf32>
      %70 = vector.broadcast %68 : vector<1x128xf32> to vector<2x128xf32>
      %71 = arith.mulf %69, %70 : vector<2x128xf32>
      %72 = arith.addf %61, %71 : vector<2x128xf32>
      %c8_i32_37 = arith.constant 8 : i32
      %73 = vector.broadcast %c8_i32_37 : i32 to vector<1x128xi32>
      %74 = arith.cmpi sge, %60, %73 : vector<1x128xi32>
      %c16_i32 = arith.constant 16 : i32
      %75 = vector.broadcast %c16_i32 : i32 to vector<1x128xi32>
      %76 = arith.cmpi slt, %60, %75 : vector<1x128xi32>
      %77 = arith.andi %74, %76 : vector<1x128xi1>
      %78 = arith.extui %77 : vector<1x128xi1> to vector<1x128xi32>
      %79 = arith.sitofp %78 : vector<1x128xi32> to vector<1x128xf32>
      %80 = vector.extract_strided_slice %59 {offsets = [2, 0], sizes = [2, 128], strides = [1, 1]} : vector<8x128xf32> to vector<2x128xf32>
      %81 = vector.broadcast %79 : vector<1x128xf32> to vector<2x128xf32>
      %82 = arith.mulf %80, %81 : vector<2x128xf32>
      %83 = arith.addf %72, %82 : vector<2x128xf32>
      %c16_i32_38 = arith.constant 16 : i32
      %84 = vector.broadcast %c16_i32_38 : i32 to vector<1x128xi32>
      %85 = arith.cmpi sge, %60, %84 : vector<1x128xi32>
      %c24_i32 = arith.constant 24 : i32
      %86 = vector.broadcast %c24_i32 : i32 to vector<1x128xi32>
      %87 = arith.cmpi slt, %60, %86 : vector<1x128xi32>
      %88 = arith.andi %85, %87 : vector<1x128xi1>
      %89 = arith.extui %88 : vector<1x128xi1> to vector<1x128xi32>
      %90 = arith.sitofp %89 : vector<1x128xi32> to vector<1x128xf32>
      %91 = vector.extract_strided_slice %59 {offsets = [4, 0], sizes = [2, 128], strides = [1, 1]} : vector<8x128xf32> to vector<2x128xf32>
      %92 = vector.broadcast %90 : vector<1x128xf32> to vector<2x128xf32>
      %93 = arith.mulf %91, %92 : vector<2x128xf32>
      %94 = arith.addf %83, %93 : vector<2x128xf32>
      %c24_i32_39 = arith.constant 24 : i32
      %95 = vector.broadcast %c24_i32_39 : i32 to vector<1x128xi32>
      %96 = arith.cmpi sge, %60, %95 : vector<1x128xi32>
      %c32_i32 = arith.constant 32 : i32
      %97 = vector.broadcast %c32_i32 : i32 to vector<1x128xi32>
      %98 = arith.cmpi slt, %60, %97 : vector<1x128xi32>
      %99 = arith.andi %96, %98 : vector<1x128xi1>
      %100 = arith.extui %99 : vector<1x128xi1> to vector<1x128xi32>
      %101 = arith.sitofp %100 : vector<1x128xi32> to vector<1x128xf32>
      %102 = vector.extract_strided_slice %59 {offsets = [6, 0], sizes = [2, 128], strides = [1, 1]} : vector<8x128xf32> to vector<2x128xf32>
      %103 = vector.broadcast %101 : vector<1x128xf32> to vector<2x128xf32>
      %104 = arith.mulf %102, %103 : vector<2x128xf32>
      %105 = arith.addf %94, %104 : vector<2x128xf32>
      %c0_40 = arith.constant 0 : index
      %c0_41 = arith.constant 0 : index
      %106 = vector.load %arg4[%c0_40, %c0_41] : memref<2x128xf32, #tpu.memory_space<vmem>>, vector<2x128xf32>
      %c0_42 = arith.constant 0 : index
      %c0_43 = arith.constant 0 : index
      %107 = vector.load %arg5[%c0_42, %c0_43] : memref<2x128xf32, #tpu.memory_space<vmem>>, vector<2x128xf32>
      %c0_44 = arith.constant 0 : index
      %c0_45 = arith.constant 0 : index
      %108 = vector.load %arg7[%c0_44, %c0_45] : memref<256x128xbf16, #tpu.memory_space<vmem>>, vector<128x128xbf16>
      %c128 = arith.constant 128 : index
      %c0_46 = arith.constant 0 : index
      %109 = vector.load %arg7[%c128, %c0_46] : memref<256x128xbf16, #tpu.memory_space<vmem>>, vector<128x128xbf16>
      %110 = arith.truncf %105 : vector<2x128xf32> to vector<2x128xbf16>
      %cst_47 = arith.constant dense<0.000000e+00> : vector<2x128xf32>
      %111 = tpu.matmul %110, %108, %cst_47 {dimension_numbers = #tpu.dot_dimension_numbers<[1], [0], [0], [1], [0, 0, 1, 1], [], []>} : vector<2x128xbf16>, vector<128x128xbf16>, vector<2x128xf32> -> vector<2x128xf32>
      %112 = vector.extract_strided_slice %54 {offsets = [2, 0], sizes = [1, 128], strides = [1, 1]} : vector<8x128xf32> to vector<1x128xf32>
      %113 = vector.broadcast %112 : vector<1x128xf32> to vector<2x128xf32>
      %114 = arith.addf %111, %113 : vector<2x128xf32>
      %115 = arith.addf %106, %114 : vector<2x128xf32>
      %116 = vector.extract_strided_slice %54 {offsets = [3, 0], sizes = [1, 128], strides = [1, 1]} : vector<8x128xf32> to vector<1x128xf32>
      %117 = vector.extract_strided_slice %54 {offsets = [4, 0], sizes = [1, 128], strides = [1, 1]} : vector<8x128xf32> to vector<1x128xf32>
      %cst_48 = arith.constant dense<0.000000e+00> : vector<2xf32>
      %118 = vector.multi_reduction <add>, %115, %cst_48 [1] : vector<2x128xf32> to vector<2xf32>
      %119 = vector.shape_cast %118 : vector<2xf32> to vector<2x1xf32>
      %120 = arith.mulf %115, %115 : vector<2x128xf32>
      %cst_49 = arith.constant dense<0.000000e+00> : vector<2xf32>
      %121 = vector.multi_reduction <add>, %120, %cst_49 [1] : vector<2x128xf32> to vector<2xf32>
      %122 = vector.shape_cast %121 : vector<2xf32> to vector<2x1xf32>
      %cst_50 = arith.constant 3.125000e-02 : f32
      %123 = vector.broadcast %cst_50 : f32 to vector<2x1xf32>
      %124 = arith.mulf %119, %123 : vector<2x1xf32>
      %cst_51 = arith.constant 3.125000e-02 : f32
      %125 = vector.broadcast %cst_51 : f32 to vector<2x1xf32>
      %126 = arith.mulf %122, %125 : vector<2x1xf32>
      %127 = arith.mulf %124, %124 : vector<2x1xf32>
      %128 = arith.subf %126, %127 : vector<2x1xf32>
      %cst_52 = arith.constant 0.000000e+00 : f32
      %129 = vector.broadcast %cst_52 : f32 to vector<2x1xf32>
      %130 = arith.maximumf %128, %129 : vector<2x1xf32>
      %131 = vector.broadcast %124 : vector<2x1xf32> to vector<2x128xf32>
      %132 = arith.subf %115, %131 : vector<2x128xf32>
      %cst_53 = arith.constant 9.99999974E-6 : f32
      %133 = vector.broadcast %cst_53 : f32 to vector<2x1xf32>
      %134 = arith.addf %130, %133 : vector<2x1xf32>
      %135 = math.rsqrt %134 : vector<2x1xf32>
      %136 = vector.broadcast %135 : vector<2x1xf32> to vector<2x128xf32>
      %137 = arith.mulf %132, %136 : vector<2x128xf32>
      %138 = vector.broadcast %116 : vector<1x128xf32> to vector<2x128xf32>
      %139 = arith.mulf %137, %138 : vector<2x128xf32>
      %140 = vector.broadcast %117 : vector<1x128xf32> to vector<2x128xf32>
      %141 = arith.addf %139, %140 : vector<2x128xf32>
      %142 = arith.truncf %141 : vector<2x128xf32> to vector<2x128xbf16>
      %cst_54 = arith.constant dense<0.000000e+00> : vector<2x128xf32>
      %143 = tpu.matmul %142, %109, %cst_54 {dimension_numbers = #tpu.dot_dimension_numbers<[1], [0], [0], [1], [0, 0, 1, 1], [], []>} : vector<2x128xbf16>, vector<128x128xbf16>, vector<2x128xf32> -> vector<2x128xf32>
      %144 = vector.extract_strided_slice %54 {offsets = [5, 0], sizes = [1, 128], strides = [1, 1]} : vector<8x128xf32> to vector<1x128xf32>
      %145 = vector.broadcast %144 : vector<1x128xf32> to vector<2x128xf32>
      %146 = arith.addf %143, %145 : vector<2x128xf32>
      %cst_55 = arith.constant 0.000000e+00 : f32
      %147 = vector.broadcast %cst_55 : f32 to vector<2x128xf32>
      %148 = arith.maximumf %146, %147 : vector<2x128xf32>
      %149 = arith.addf %141, %148 : vector<2x128xf32>
      %150 = vector.extract_strided_slice %54 {offsets = [6, 0], sizes = [1, 128], strides = [1, 1]} : vector<8x128xf32> to vector<1x128xf32>
      %151 = vector.extract_strided_slice %54 {offsets = [7, 0], sizes = [1, 128], strides = [1, 1]} : vector<8x128xf32> to vector<1x128xf32>
      %cst_56 = arith.constant dense<0.000000e+00> : vector<2xf32>
      %152 = vector.multi_reduction <add>, %149, %cst_56 [1] : vector<2x128xf32> to vector<2xf32>
      %153 = vector.shape_cast %152 : vector<2xf32> to vector<2x1xf32>
      %154 = arith.mulf %149, %149 : vector<2x128xf32>
      %cst_57 = arith.constant dense<0.000000e+00> : vector<2xf32>
      %155 = vector.multi_reduction <add>, %154, %cst_57 [1] : vector<2x128xf32> to vector<2xf32>
      %156 = vector.shape_cast %155 : vector<2xf32> to vector<2x1xf32>
      %cst_58 = arith.constant 3.125000e-02 : f32
      %157 = vector.broadcast %cst_58 : f32 to vector<2x1xf32>
      %158 = arith.mulf %153, %157 : vector<2x1xf32>
      %cst_59 = arith.constant 3.125000e-02 : f32
      %159 = vector.broadcast %cst_59 : f32 to vector<2x1xf32>
      %160 = arith.mulf %156, %159 : vector<2x1xf32>
      %161 = arith.mulf %158, %158 : vector<2x1xf32>
      %162 = arith.subf %160, %161 : vector<2x1xf32>
      %cst_60 = arith.constant 0.000000e+00 : f32
      %163 = vector.broadcast %cst_60 : f32 to vector<2x1xf32>
      %164 = arith.maximumf %162, %163 : vector<2x1xf32>
      %165 = vector.broadcast %158 : vector<2x1xf32> to vector<2x128xf32>
      %166 = arith.subf %149, %165 : vector<2x128xf32>
      %cst_61 = arith.constant 9.99999974E-6 : f32
      %167 = vector.broadcast %cst_61 : f32 to vector<2x1xf32>
      %168 = arith.addf %164, %167 : vector<2x1xf32>
      %169 = math.rsqrt %168 : vector<2x1xf32>
      %170 = vector.broadcast %169 : vector<2x1xf32> to vector<2x128xf32>
      %171 = arith.mulf %166, %170 : vector<2x128xf32>
      %172 = vector.broadcast %150 : vector<1x128xf32> to vector<2x128xf32>
      %173 = arith.mulf %171, %172 : vector<2x128xf32>
      %174 = vector.broadcast %151 : vector<1x128xf32> to vector<2x128xf32>
      %175 = arith.addf %173, %174 : vector<2x128xf32>
      %176 = arith.mulf %175, %107 : vector<2x128xf32>
      %c0_62 = arith.constant 0 : index
      %c0_63 = arith.constant 0 : index
      %177 = vector.load %arg9[%c0_62, %c0_63] : memref<2x128xf32, #tpu.memory_space<vmem>>, vector<2x128xf32>
      tpu.vector_store %arg9[%c0_62, %c0_63], %176 {strides = array<i32>} : memref<2x128xf32, #tpu.memory_space<vmem>>, vector<2x128xf32>,
    } else {
    }
    return
  }
  func.func @transform_0(%arg0: i32, %arg1: memref<1xi32, #tpu.memory_space<smem>>) -> (i32, i32) {
    %c0_i32 = arith.constant 0 : i32
    %c0_i32_0 = arith.constant 0 : i32
    return %arg0, %c0_i32 : i32, i32
  }
  func.func @transform_1(%arg0: i32, %arg1: memref<1xi32, #tpu.memory_space<smem>>) -> (i32, i32) {
    %c0_i32 = arith.constant 0 : i32
    %c0_i32_0 = arith.constant 0 : i32
    %c0_i32_1 = arith.constant 0 : i32
    return %c0_i32, %c0_i32_0 : i32, i32
  }
  func.func @transform_2(%arg0: i32, %arg1: memref<1xi32, #tpu.memory_space<smem>>) -> (i32, i32) {
    %c0_i32 = arith.constant 0 : i32
    %c0_i32_0 = arith.constant 0 : i32
    %c0_i32_1 = arith.constant 0 : i32
    return %c0_i32, %c0_i32_0 : i32, i32
  }
  func.func @transform_3(%arg0: i32, %arg1: memref<1xi32, #tpu.memory_space<smem>>) -> (i32, i32) {
    %c0_i32 = arith.constant 0 : i32
    %c0_i32_0 = arith.constant 0 : i32
    %c0_i32_1 = arith.constant 0 : i32
    return %c0_i32, %c0_i32_0 : i32, i32
  }
  func.func @transform_4(%arg0: i32, %arg1: memref<1xi32, #tpu.memory_space<smem>>) -> (i32, i32) {
    %c0_i32 = arith.constant 0 : i32
    %c0_i32_0 = arith.constant 0 : i32
    %c0_i32_1 = arith.constant 0 : i32
    return %c0_i32, %c0_i32_0 : i32, i32
  }
  func.func @transform_5(%arg0: i32, %arg1: memref<1xi32, #tpu.memory_space<smem>>) -> (i32, i32) {
    %c0_i32 = arith.constant 0 : i32
    %c0_i32_0 = arith.constant 0 : i32
    %c0_i32_1 = arith.constant 0 : i32
    return %c0_i32, %c0_i32_0 : i32, i32
  }
  func.func @transform_6(%arg0: i32, %arg1: memref<1xi32, #tpu.memory_space<smem>>) -> (i32, i32) {
    %c0_i32 = arith.constant 0 : i32
    %c0_i32_0 = arith.constant 0 : i32
    %c0_i32_1 = arith.constant 0 : i32
    return %c0_i32, %c0_i32_0 : i32, i32
  }
  func.func @transform_7(%arg0: i32, %arg1: memref<1xi32, #tpu.memory_space<smem>>) -> (i32, i32) {
    %c0_i32 = arith.constant 0 : i32
    %c0_i32_0 = arith.constant 0 : i32
    %c0_i32_1 = arith.constant 0 : i32
    return %c0_i32, %c0_i32_0 : i32, i32
  }
}

</mosaic_0001>

<llo_original>
// kernel: tpu_custom_call.1
$region0: #{tpu_custom_call.1}
  #allocation0 [shape = 'u32[]', space=smem, size = 0x4, offset = 0x4, fixed_abs, tag = 'smem constant byte address 0x4 - core index']
  #allocation1 [shape = 'u32[144,128]{1,0:T(1,128)}', space=vmem, size = 0x12000, scoped, tag = 'internal scratch']
  #allocation2 [shape = 'f32[8,1]{1,0:T(8,128)}', space=vmem, size = 0x1000, scoped, tag = 'scratch operand']
  #allocation3 [shape = 'f32[8,1]{1,0:T(8,128)}', space=vmem, size = 0x1000, scoped, tag = 'scratch operand']
  #allocation4 [shape = 'f32[8,128]{1,0:T(8,128)}', space=vmem, size = 0x1000, scoped, tag = 'scratch operand']
  #allocation5 [shape = 's32[1]{0}', space=sflag, size = 0x4, scoped, tag = 'scoped memory for tpu_custom_call.1']
  #allocation6 [shape = 's32[1]{0:T(128)S(6)}', space=smem, size = 0x200, scoped, tag = 'prefetched SMEM operand 0']
  %s0 = inlined_call_operand.<no memory space> [shape: s32[1], index: 0, kind: input, shape index: {}]
  %s1 = inlined_call_operand.vmem [shape: bf16[384,64], index: 1, kind: input, shape index: {}]
  %s2 = inlined_call_operand.vmem [shape: bf16[8,128], index: 2, kind: input, shape index: {}]
  %s3 = inlined_call_operand.vmem [shape: f32[2,128], index: 3, kind: input, shape index: {}]
  %s4 = inlined_call_operand.vmem [shape: f32[2,128], index: 4, kind: input, shape index: {}]
  %s5 = inlined_call_operand.vmem [shape: bf16[128,128], index: 5, kind: input, shape index: {}]
  %s6 = inlined_call_operand.vmem [shape: bf16[256,128], index: 6, kind: input, shape index: {}]
  %s7 = inlined_call_operand.vmem [shape: f32[8,128], index: 7, kind: input, shape index: {}]
  %s8 = inlined_call_operand.hbm [shape: f32[2,128], index: 8, kind: output, shape index: {}]
  %s9 = sld [smem:[#allocation0]]
  $region69: #{tpu_custom_call.1} parent=0
    _
  %s11 = ssub.s32 1, %s9
  %s12 = scalar_select 0, %s11, %s9
  %13 = sst [smem:[#allocation6]] %s0
  $region1: #{tpu_custom_call.1} parent=0
    #allocation7 [shape = 'u8[1024]{0}', space=vmem, size = 0x400, scoped, tag = 'output window, operand 0, single buffered']
    #allocation8 [shape = 's32[2]{0}', space=sflag, size = 0x8, scoped, tag = 'scoped memory for tpu_custom_call.1']
    %14 = vsyncpa [#allocation8], 0
    loop: start=0, step=1, limit=5
    $region2: #{tpu_custom_call.1} parent=1 // loop_pre_header
      _
    $region3: #{tpu_custom_call.1} parent=1 // loop_header
      %s16 = sphi 0, %s20
      %p17 = scmp.ge.s32.totalorder %s16, 5
      %s26 = sphi 0, %s28
      %s29 = sphi 0, %s26
      %s30 = sphi 0, %s29
      %s46 = sphi 0, %s30
      %s50 = sphi 0, %s50
      %s52 = sphi 0, %s50
      %s53 = sphi 0, %s52
      %s67 = sphi 0, %s53
      %s71 = sphi 0, %s71
      %s73 = sphi 0, %s71
      %s74 = sphi 0, %s73
      %s88 = sphi 0, %s74
      %s92 = sphi 0, %s92
      %s94 = sphi 0, %s92
      %s95 = sphi 0, %s94
      %s109 = sphi 0, %s95
      %s113 = sphi 0, %s113
      %s115 = sphi 0, %s113
      %s116 = sphi 0, %s115
      %s130 = sphi 0, %s116
      %s134 = sphi 0, %s134
      %s136 = sphi 0, %s134
      %s137 = sphi 0, %s136
      %s151 = sphi 0, %s137
      %s155 = sphi 0, %s155
      %s157 = sphi 0, %s155
      %s158 = sphi 0, %s157
      %s172 = sphi 0, %s158
      %s176 = sphi 0, %s176
      %s178 = sphi 0, %s176
      %s179 = sphi 0, %s178
      %s193 = sphi 0, %s179
    $region4: #{tpu_custom_call.1} parent=1 // loop_header_branch
      %19 = sbr.rel (%p17) target = $region8
    $region5: #{tpu_custom_call.1} parent=1 // loop_body
      %s21 = ssub.s32 %s16, 1
      %s22 = ssub.s32 %s16, 2
      %s23 = sadd.s32 %s16, 1
      %s24 = ssub.s32 %s16, %s23
      %p25 = scmp.eq.s32.totalorder %s24, 0
      %s27 = sadd.s32 %s26, 1
      %s28 = scalar_select %p25, %s26, %s27
      %p31 = pneg %p25
      %p32 = scmp.eq.s32.totalorder %s16, 2
      %p33 = por %p31, %p32
      %p34 = scmp.ne.s32.totalorder %s26, %s29
      %p35 = scmp.eq.s32.totalorder %s16, 0
      %p36 = por %p34, %p35
      %p37 = scmp.ne.s32.totalorder %s26, %s29
      %p38 = scmp.eq.s32.totalorder %s21, 2
      %p39 = por %p37, %p38
      %p40 = scmp.ne.s32.totalorder %s29, %s30
      %p41 = scmp.eq.s32.totalorder %s21, 0
      %p42 = por %p40, %p41
      %p43 = scmp.ne.s32.totalorder %s29, %s30
      %p44 = scmp.eq.s32.totalorder %s22, 2
      %p45 = por %p43, %p44
      %p47 = scmp.ne.s32.totalorder %s30, %s46
      %p48 = scmp.eq.s32.totalorder %s22, 0
      %p49 = por %p47, %p48
      %s51 = sadd.s32 %s50, 1
      %p54 = scmp.eq.s32.totalorder %s16, 2
      %p55 = scmp.ne.s32.totalorder %s50, %s52
      %p56 = scmp.eq.s32.totalorder %s16, 0
      %p57 = por %p55, %p56
      %p58 = scmp.ne.s32.totalorder %s50, %s52
      %p59 = scmp.eq.s32.totalorder %s21, 2
      %p60 = por %p58, %p59
      %p61 = scmp.ne.s32.totalorder %s52, %s53
      %p62 = scmp.eq.s32.totalorder %s21, 0
      %p63 = por %p61, %p62
      %p64 = scmp.ne.s32.totalorder %s52, %s53
      %p65 = scmp.eq.s32.totalorder %s22, 2
      %p66 = por %p64, %p65
      %p68 = scmp.ne.s32.totalorder %s53, %s67
      %p69 = scmp.eq.s32.totalorder %s22, 0
      %p70 = por %p68, %p69
      %s72 = sadd.s32 %s71, 1
      %p75 = scmp.eq.s32.totalorder %s16, 2
      %p76 = scmp.ne.s32.totalorder %s71, %s73
      %p77 = scmp.eq.s32.totalorder %s16, 0
      %p78 = por %p76, %p77
      %p79 = scmp.ne.s32.totalorder %s71, %s73
      %p80 = scmp.eq.s32.totalorder %s21, 2
      %p81 = por %p79, %p80
      %p82 = scmp.ne.s32.totalorder %s73, %s74
      %p83 = scmp.eq.s32.totalorder %s21, 0
      %p84 = por %p82, %p83
      %p85 = scmp.ne.s32.totalorder %s73, %s74
      %p86 = scmp.eq.s32.totalorder %s22, 2
      %p87 = por %p85, %p86
      %p89 = scmp.ne.s32.totalorder %s74, %s88
      %p90 = scmp.eq.s32.totalorder %s22, 0
      %p91 = por %p89, %p90
      %s93 = sadd.s32 %s92, 1
      %p96 = scmp.eq.s32.totalorder %s16, 2
      %p97 = scmp.ne.s32.totalorder %s92, %s94
      %p98 = scmp.eq.s32.totalorder %s16, 0
      %p99 = por %p97, %p98
      %p100 = scmp.ne.s32.totalorder %s92, %s94
      %p101 = scmp.eq.s32.totalorder %s21, 2
      %p102 = por %p100, %p101
      %p103 = scmp.ne.s32.totalorder %s94, %s95
      %p104 = scmp.eq.s32.totalorder %s21, 0
      %p105 = por %p103, %p104
      %p106 = scmp.ne.s32.totalorder %s94, %s95
      %p107 = scmp.eq.s32.totalorder %s22, 2
      %p108 = por %p106, %p107
      %p110 = scmp.ne.s32.totalorder %s95, %s109
      %p111 = scmp.eq.s32.totalorder %s22, 0
      %p112 = por %p110, %p111
      %s114 = sadd.s32 %s113, 1
      %p117 = scmp.eq.s32.totalorder %s16, 2
      %p118 = scmp.ne.s32.totalorder %s113, %s115
      %p119 = scmp.eq.s32.totalorder %s16, 0
      %p120 = por %p118, %p119
      %p121 = scmp.ne.s32.totalorder %s113, %s115
      %p122 = scmp.eq.s32.totalorder %s21, 2
      %p123 = por %p121, %p122
      %p124 = scmp.ne.s32.totalorder %s115, %s116
      %p125 = scmp.eq.s32.totalorder %s21, 0
      %p126 = por %p124, %p125
      %p127 = scmp.ne.s32.totalorder %s115, %s116
      %p128 = scmp.eq.s32.totalorder %s22, 2
      %p129 = por %p127, %p128
      %p131 = scmp.ne.s32.totalorder %s116, %s130
      %p132 = scmp.eq.s32.totalorder %s22, 0
      %p133 = por %p131, %p132
      %s135 = sadd.s32 %s134, 1
      %p138 = scmp.eq.s32.totalorder %s16, 2
      %p139 = scmp.ne.s32.totalorder %s134, %s136
      %p140 = scmp.eq.s32.totalorder %s16, 0
      %p141 = por %p139, %p140
      %p142 = scmp.ne.s32.totalorder %s134, %s136
      %p143 = scmp.eq.s32.totalorder %s21, 2
      %p144 = por %p142, %p143
      %p145 = scmp.ne.s32.totalorder %s136, %s137
      %p146 = scmp.eq.s32.totalorder %s21, 0
      %p147 = por %p145, %p146
      %p148 = scmp.ne.s32.totalorder %s136, %s137
      %p149 = scmp.eq.s32.totalorder %s22, 2
      %p150 = por %p148, %p149
      %p152 = scmp.ne.s32.totalorder %s137, %s151
      %p153 = scmp.eq.s32.totalorder %s22, 0
      %p154 = por %p152, %p153
      %s156 = sadd.s32 %s155, 1
      %p159 = scmp.eq.s32.totalorder %s16, 2
      %p160 = scmp.ne.s32.totalorder %s155, %s157
      %p161 = scmp.eq.s32.totalorder %s16, 0
      %p162 = por %p160, %p161
      %p163 = scmp.ne.s32.totalorder %s155, %s157
      %p164 = scmp.eq.s32.totalorder %s21, 2
      %p165 = por %p163, %p164
      %p166 = scmp.ne.s32.totalorder %s157, %s158
      %p167 = scmp.eq.s32.totalorder %s21, 0
      %p168 = por %p166, %p167
      %p169 = scmp.ne.s32.totalorder %s157, %s158
      %p170 = scmp.eq.s32.totalorder %s22, 2
      %p171 = por %p169, %p170
      %p173 = scmp.ne.s32.totalorder %s158, %s172
      %p174 = scmp.eq.s32.totalorder %s22, 0
      %p175 = por %p173, %p174
      %s177 = sadd.s32 %s176, 1
      %p180 = scmp.eq.s32.totalorder %s16, 2
      %p181 = scmp.ne.s32.totalorder %s176, %s178
      %p182 = scmp.eq.s32.totalorder %s16, 0
      %p183 = por %p181, %p182
      %p184 = scmp.ne.s32.totalorder %s176, %s178
      %p185 = scmp.eq.s32.totalorder %s21, 2
      %p186 = por %p184, %p185
      %p187 = scmp.ne.s32.totalorder %s178, %s179
      %p188 = scmp.eq.s32.totalorder %s21, 0
      %p189 = por %p187, %p188
      %p190 = scmp.ne.s32.totalorder %s178, %s179
      %p191 = scmp.eq.s32.totalorder %s22, 2
      %p192 = por %p190, %p191
      %p194 = scmp.ne.s32.totalorder %s179, %s193
      %p195 = scmp.eq.s32.totalorder %s22, 0
      %p196 = por %p194, %p195
      %p197 = scmp.le.s32.totalorder 1, %s16
      %p198 = scmp.lt.s32.totalorder %s16, 4
      %p199 = pnand %p197, %p198
      %p200 = pneg %p199
      // Predicated region
      $region9: #{tpu_custom_call.1} parent=5 // pred_check
        _
      $region10: #{tpu_custom_call.1} parent=5 // pred_check_branch
        %202 = sbr.rel (%p199) target = $region12
      $region11: #{tpu_custom_call.1} parent=5 // pred_region
        %s203 = ssub.s32 %s16, 1
        // Predicated region
        $region13: #{tpu_custom_call.1} parent=11 // pred_check
          %p204 = pneg %p63
        $region14: #{tpu_custom_call.1} parent=11 // pred_check_branch
          %206 = sbr.rel (%p204) target = $region16
        $region15: #{tpu_custom_call.1} parent=11 // pred_region
          _
        $region16: #{tpu_custom_call.1} parent=11 // pred_fallthru
          _
        // Predicated region
        $region17: #{tpu_custom_call.1} parent=11 // pred_check
          %p207 = pneg %p84
        $region18: #{tpu_custom_call.1} parent=11 // pred_check_branch
          %209 = sbr.rel (%p207) target = $region20
        $region19: #{tpu_custom_call.1} parent=11 // pred_region
          _
        $region20: #{tpu_custom_call.1} parent=11 // pred_fallthru
          _
        // Predicated region
        $region21: #{tpu_custom_call.1} parent=11 // pred_check
          %p210 = pneg %p105
        $region22: #{tpu_custom_call.1} parent=11 // pred_check_branch
          %212 = sbr.rel (%p210) target = $region24
        $region23: #{tpu_custom_call.1} parent=11 // pred_region
          _
        $region24: #{tpu_custom_call.1} parent=11 // pred_fallthru
          _
        // Predicated region
        $region25: #{tpu_custom_call.1} parent=11 // pred_check
          %p213 = pneg %p126
        $region26: #{tpu_custom_call.1} parent=11 // pred_check_branch
          %215 = sbr.rel (%p213) target = $region28
        $region27: #{tpu_custom_call.1} parent=11 // pred_region
          _
        $region28: #{tpu_custom_call.1} parent=11 // pred_fallthru
          _
        // Predicated region
        $region29: #{tpu_custom_call.1} parent=11 // pred_check
          %p216 = pneg %p147
        $region30: #{tpu_custom_call.1} parent=11 // pred_check_branch
          %218 = sbr.rel (%p216) target = $region32
        $region31: #{tpu_custom_call.1} parent=11 // pred_region
          _
        $region32: #{tpu_custom_call.1} parent=11 // pred_fallthru
          _
        // Predicated region
        $region33: #{tpu_custom_call.1} parent=11 // pred_check
          %p219 = pneg %p168
        $region34: #{tpu_custom_call.1} parent=11 // pred_check_branch
          %221 = sbr.rel (%p219) target = $region36
        $region35: #{tpu_custom_call.1} parent=11 // pred_region
          _
        $region36: #{tpu_custom_call.1} parent=11 // pred_fallthru
          _
      $region12: #{tpu_custom_call.1} parent=5 // pred_fallthru
        _
      %p222 = scmp.lt.s32.totalorder %s16, 3
      // Predicated region
      $region37: #{tpu_custom_call.1} parent=5 // pred_check
        %p223 = pneg %p222
      $region38: #{tpu_custom_call.1} parent=5 // pred_check_branch
        %225 = sbr.rel (%p223) target = $region40
      $region39: #{tpu_custom_call.1} parent=5 // pred_region
        // Predicated region
        $region41: #{tpu_custom_call.1} parent=39 // pred_check
          %p226 = pneg %p36
        $region42: #{tpu_custom_call.1} parent=39 // pred_check_branch
          %228 = sbr.rel (%p226) target = $region44
        $region43: #{tpu_custom_call.1} parent=39 // pred_region
          %s229 = smul.u32 16, %s16
          %p230 = scmp.lt.s32.totalorder %s229, 47
          %s231 = scalar_select %p230, %s229, 47
          %s232 = smul.addr %s231, 4
          %s233 = scalar_lea.vmem %s1, %s232
          %s234 = smul.u32 16, %s16
        $region44: #{tpu_custom_call.1} parent=39 // pred_fallthru
          _
      $region40: #{tpu_custom_call.1} parent=5 // pred_fallthru
        _
      %p235 = scmp.le.s32.totalorder 1, %s16
      %p236 = scmp.lt.s32.totalorder %s16, 4
      %p237 = pnand %p235, %p236
      %p238 = pneg %p237
      // Predicated region
      $region45: #{tpu_custom_call.1} parent=5 // pred_check
        _
      $region46: #{tpu_custom_call.1} parent=5 // pred_check_branch
        %240 = sbr.rel (%p237) target = $region48
      $region47: #{tpu_custom_call.1} parent=5 // pred_region
        %s241 = ssub.s32 %s16, 1
        %s242 = smul.u32 16, %s21
        %p243 = scmp.lt.s32.totalorder %s242, 47
        %s244 = scalar_select %p243, %s242, 47
        %s245 = smul.addr %s244, 4
        %s246 = scalar_lea.vmem %s1, %s245
        %p247 = pneg %p42
        %p248 = pneg %p39
        %p249 = pneg %p63
        %p250 = pneg %p60
        %p251 = pneg %p84
        %p252 = pneg %p81
        %p253 = pneg %p105
        %p254 = pneg %p102
        %p255 = pneg %p126
        %p256 = pneg %p123
        %p257 = pneg %p147
        %p258 = pneg %p144
        %p259 = pneg %p168
        %p260 = pneg %p165
        %p261 = pneg %p189
        %p262 = pneg %p186
        %s263 = smul.u32 16, %s21
        %p264 = scmp.lt.s32.totalorder %s263, 47
        %s265 = scalar_select %p264, %s263, 47
        %s266 = smul.addr %s265, 4
        %s267 = scalar_lea.vmem %s1, %s266
        %s268 = smul.u32 16, %s21
        %p270 = scmp.eq.s32.totalorder %s21, 0
        // Predicated region
        $region49: #{tpu_custom_call.1} parent=47 // pred_check
          %p271 = pneg %p270
        $region50: #{tpu_custom_call.1} parent=47 // pred_check_branch
          %273 = sbr.rel (%p271) target = $region52
        $region51: #{tpu_custom_call.1} parent=47 // pred_region
          %vm274 = vcmask 7168
          %275 = vst.msk [vmem:[#allocation2] sm:$0xff] %vm274, -1e+30
          %276 = vst.msk [vmem:[#allocation3] sm:$0xff] %vm274, 0.0
          %277 = vst [vmem:[#allocation4] sm:$0xff] 0.0
        $region52: #{tpu_custom_call.1} parent=47 // pred_fallthru
          _
        %v278 = vld [vmem:[%s7] sm:$0xff]
        %s279 = sld [smem:[#allocation6]]
        %v280 = vld [vmem:[%s267] sm:$0xf]
        %v281 = vld [vmem:[%s267 + $0x4] sm:$0xf]
        %v282 = vld [vmem:[%s267 + $0x8] sm:$0xf]
        %v283 = vld [vmem:[%s267 + $0xc] sm:$0xf]
        %v284 = vld [vmem:[%s267 + $0x10] sm:$0xf]
        %v285 = vld [vmem:[%s267 + $0x14] sm:$0xf]
        %v286 = vld [vmem:[%s267 + $0x18] sm:$0xf]
        %v287 = vld [vmem:[%s267 + $0x1c] sm:$0xf]
        %v288 = vld [vmem:[%s267 + $0x20] sm:$0xf]
        %v289 = vld [vmem:[%s267 + $0x24] sm:$0xf]
        %v290 = vld [vmem:[%s267 + $0x28] sm:$0xf]
        %v291 = vld [vmem:[%s267 + $0x2c] sm:$0xf]
        %v292 = vld [vmem:[%s267 + $0x30] sm:$0xf]
        %v293 = vld [vmem:[%s267 + $0x34] sm:$0xf]
        %v294 = vld [vmem:[%s267 + $0x38] sm:$0xf]
        %v295 = vld [vmem:[%s267 + $0x3c] sm:$0xf]
        %v296 = vld [vmem:[%s5] sm:$0xf]
        %v297 = vld [vmem:[%s5 + $0x4] sm:$0xf]
        %v298 = vld [vmem:[%s5 + $0x8] sm:$0xf]
        %v299 = vld [vmem:[%s5 + $0xc] sm:$0xf]
        %v300 = vld [vmem:[%s5 + $0x10] sm:$0xf]
        %v301 = vld [vmem:[%s5 + $0x14] sm:$0xf]
        %v302 = vld [vmem:[%s5 + $0x18] sm:$0xf]
        %v303 = vld [vmem:[%s5 + $0x1c] sm:$0xf]
        %v304 = vld [vmem:[%s5 + $0x20] sm:$0xf]
        %v305 = vld [vmem:[%s5 + $0x24] sm:$0xf]
        %v306 = vld [vmem:[%s5 + $0x28] sm:$0xf]
        %v307 = vld [vmem:[%s5 + $0x2c] sm:$0xf]
        %v308 = vld [vmem:[%s5 + $0x30] sm:$0xf]
        %v309 = vld [vmem:[%s5 + $0x34] sm:$0xf]
        %v310 = vld [vmem:[%s5 + $0x38] sm:$0xf]
        %v311 = vld [vmem:[%s5 + $0x3c] sm:$0xf]
        %v312 = vlaneseq
        %v313 = vshrl.u32 %v312, 7
        %v314 = vsub.s32 0, %v313
        %v315 = vrot.slane %v278, %v314
        %v332 = vunpack.c.l.b16 %v280
        %v333 = vunpack.c.l.b16 %v281
        %v334 = vunpack.c.l.b16 %v282
        %v335 = vunpack.c.l.b16 %v283
        %v336 = vunpack.c.l.b16 %v284
        %v337 = vunpack.c.l.b16 %v285
        %v338 = vunpack.c.l.b16 %v286
        %v339 = vunpack.c.l.b16 %v287
        %v340 = vunpack.c.l.b16 %v288
        %v341 = vunpack.c.l.b16 %v289
        %v342 = vunpack.c.l.b16 %v290
        %v343 = vunpack.c.l.b16 %v291
        %v344 = vunpack.c.l.b16 %v292
        %v345 = vunpack.c.l.b16 %v293
        %v346 = vunpack.c.l.b16 %v294
        %v347 = vunpack.c.l.b16 %v295
        %v348 = vpack.c.b16 %v333, %v332
        %v349 = vpack.c.b16 %v335, %v334
        %v350 = vpack.c.b16 %v337, %v336
        %v351 = vpack.c.b16 %v339, %v338
        %v352 = vpack.c.b16 %v341, %v340
        %v353 = vpack.c.b16 %v343, %v342
        %v354 = vpack.c.b16 %v345, %v344
        %v355 = vpack.c.b16 %v347, %v346
        %v364 = vunpack.c.l.b16 %v296
        %v365 = vunpack.c.l.b16 %v297
        %v366 = vunpack.c.l.b16 %v298
        %v367 = vunpack.c.l.b16 %v299
        %v368 = vunpack.c.l.b16 %v300
        %v369 = vunpack.c.l.b16 %v301
        %v370 = vunpack.c.l.b16 %v302
        %v371 = vunpack.c.l.b16 %v303
        %v372 = vpack.c.b16 %v365, %v364
        %v373 = vpack.c.b16 %v367, %v366
        %v374 = vpack.c.b16 %v369, %v368
        %v375 = vpack.c.b16 %v371, %v370
        %vm380 = vcmask 523264
        %v382 = vsel %vm380, %v348, 0
        %v385 = vsel %vm380, %v349, 0
        %v388 = vsel %vm380, %v350, 0
        %v391 = vsel %vm380, %v351, 0
        %v394 = vsel %vm380, %v352, 0
        %v397 = vsel %vm380, %v353, 0
        %v400 = vsel %vm380, %v354, 0
        %v403 = vsel %vm380, %v355, 0
        %405 = vmatprep.subr.bf16.mxu0 0
        %406 = vmatpush1.bf16.msra.mxu0 %v372
        %407 = vmatprep.subr.bf16.mxu0 0
        %408 = vmatpush1.bf16.msra.mxu0 %v373
        %409 = vmatprep.subr.bf16.mxu0 0
        %410 = vmatpush1.bf16.msra.mxu0 %v374
        %411 = vmatprep.subr.bf16.mxu0 0
        %412 = vmatpush1.bf16.msra.mxu0 %v375
        %413 = vmatprep.subr.bf16.mxu0 0
        %414 = vmatpush1.bf16.msra.mxu0 0
        %415 = vmatprep.subr.bf16.mxu0 0
        %416 = vmatpush1.bf16.msra.mxu0 0
        %417 = vmatprep.subr.bf16.mxu0 0
        %418 = vmatpush1.bf16.msra.mxu0 0
        %419 = vmatprep.subr.bf16.mxu0 0
        %420 = vmatpush1.bf16.msra.mxu0 0
        %421 = vmatprep.subr.bf16.mxu0 0
        %422 = vmatpush1.bf16.msra.mxu0 0
        %423 = vmatprep.subr.bf16.mxu0 0
        %424 = vmatpush1.bf16.msra.mxu0 0
        %425 = vmatprep.subr.bf16.mxu0 0
        %426 = vmatpush1.bf16.msra.mxu0 0
        %427 = vmatprep.subr.bf16.mxu0 0
        %428 = vmatpush1.bf16.msra.mxu0 0
        %429 = vmatprep.subr.bf16.mxu0 0
        %430 = vmatpush1.bf16.msra.mxu0 0
        %431 = vmatprep.subr.bf16.mxu0 0
        %432 = vmatpush1.bf16.msra.mxu0 0
        %433 = vmatprep.subr.bf16.mxu0 0
        %434 = vmatpush1.bf16.msra.mxu0 0
        %435 = vmatprep.subr.bf16.mxu0 0
        %436 = vmatpush1.bf16.msra.mxu0 0
        %437 = vmatprep.mubr.bf16.mxu0 0
        %438 = vmatmul.mubr.bf16.gmra.mrb[0].mxu0 %v382
        %v439 = vpop.f32.mrb[0].mxu0
        %v440 = vadd.f32 %v315, %v439
        %v441 = vpop.f32.mrb[0].mxu0
        %v442 = vpop.f32.mrb[0].mxu0
        %v443 = vadd.f32 %v315, %v442
        %v444 = vpop.f32.mrb[0].mxu0
        %445 = vmatprep.mubr.bf16.mxu0 0
        %446 = vmatmul.mubr.bf16.gmra.mrb[0].mxu0 %v385
        %v447 = vpop.f32.mrb[0].mxu0
        %v448 = vadd.f32 %v315, %v447
        %v449 = vpop.f32.mrb[0].mxu0
        %v450 = vpop.f32.mrb[0].mxu0
        %v451 = vadd.f32 %v315, %v450
        %v452 = vpop.f32.mrb[0].mxu0
        %453 = vmatprep.mubr.bf16.mxu0 0
        %454 = vmatmul.mubr.bf16.gmra.mrb[0].mxu0 %v388
        %v455 = vpop.f32.mrb[0].mxu0
        %v456 = vadd.f32 %v315, %v455
        %v457 = vpop.f32.mrb[0].mxu0
        %v458 = vpop.f32.mrb[0].mxu0
        %v459 = vadd.f32 %v315, %v458
        %v460 = vpop.f32.mrb[0].mxu0
        %461 = vmatprep.mubr.bf16.mxu0 0
        %462 = vmatmul.mubr.bf16.gmra.mrb[0].mxu0 %v391
        %v463 = vpop.f32.mrb[0].mxu0
        %v464 = vadd.f32 %v315, %v463
        %v465 = vpop.f32.mrb[0].mxu0
        %v466 = vpop.f32.mrb[0].mxu0
        %v467 = vadd.f32 %v315, %v466
        %v468 = vpop.f32.mrb[0].mxu0
        %469 = vmatprep.mubr.bf16.mxu0 0
        %470 = vmatmul.mubr.bf16.gmra.mrb[0].mxu0 %v394
        %v471 = vpop.f32.mrb[0].mxu0
        %v472 = vadd.f32 %v315, %v471
        %v473 = vpop.f32.mrb[0].mxu0
        %v474 = vpop.f32.mrb[0].mxu0
        %v475 = vadd.f32 %v315, %v474
        %v476 = vpop.f32.mrb[0].mxu0
        %477 = vmatprep.mubr.bf16.mxu0 0
        %478 = vmatmul.mubr.bf16.gmra.mrb[0].mxu0 %v397
        %v479 = vpop.f32.mrb[0].mxu0
        %v480 = vadd.f32 %v315, %v479
        %v481 = vpop.f32.mrb[0].mxu0
        %v482 = vpop.f32.mrb[0].mxu0
        %v483 = vadd.f32 %v315, %v482
        %v484 = vpop.f32.mrb[0].mxu0
        %485 = vmatprep.mubr.bf16.mxu0 0
        %486 = vmatmul.mubr.bf16.gmra.mrb[0].mxu0 %v400
        %v487 = vpop.f32.mrb[0].mxu0
        %v488 = vadd.f32 %v315, %v487
        %v489 = vpop.f32.mrb[0].mxu0
        %v490 = vpop.f32.mrb[0].mxu0
        %v491 = vadd.f32 %v315, %v490
        %v492 = vpop.f32.mrb[0].mxu0
        %493 = vmatprep.mubr.bf16.mxu0 0
        %494 = vmatmul.mubr.bf16.gmra.mrb[0].mxu0 %v403
        %v495 = vpop.f32.mrb[0].mxu0
        %v496 = vadd.f32 %v315, %v495
        %v497 = vpop.f32.mrb[0].mxu0
        %v498 = vpop.f32.mrb[0].mxu0
        %v499 = vadd.f32 %v315, %v498
        %v500 = vpop.f32.mrb[0].mxu0
        %501 = vdwg.mxu0
        %v502 = vlaneseq
        %v503 = vshrl.u32 %v502, 7
        %v504 = vsub.s32 1, %v503
        %v505 = vrot.slane %v278, %v504
        %v514 = vunpack.c.l.b16 %v304
        %v515 = vunpack.c.l.b16 %v305
        %v516 = vunpack.c.l.b16 %v306
        %v517 = vunpack.c.l.b16 %v307
        %v518 = vunpack.c.l.b16 %v308
        %v519 = vunpack.c.l.b16 %v309
        %v520 = vunpack.c.l.b16 %v310
        %v521 = vunpack.c.l.b16 %v311
        %v522 = vpack.c.b16 %v515, %v514
        %v523 = vpack.c.b16 %v517, %v516
        %v524 = vpack.c.b16 %v519, %v518
        %v525 = vpack.c.b16 %v521, %v520
        %530 = vmatprep.subr.bf16.mxu0 0
        %531 = vmatpush1.bf16.msra.mxu0 %v522
        %532 = vmatprep.subr.bf16.mxu0 0
        %533 = vmatpush1.bf16.msra.mxu0 %v523
        %534 = vmatprep.subr.bf16.mxu0 0
        %535 = vmatpush1.bf16.msra.mxu0 %v524
        %536 = vmatprep.subr.bf16.mxu0 0
        %537 = vmatpush1.bf16.msra.mxu0 %v525
        %538 = vmatprep.subr.bf16.mxu0 0
        %539 = vmatpush1.bf16.msra.mxu0 0
        %540 = vmatprep.subr.bf16.mxu0 0
        %541 = vmatpush1.bf16.msra.mxu0 0
        %542 = vmatprep.subr.bf16.mxu0 0
        %543 = vmatpush1.bf16.msra.mxu0 0
        %544 = vmatprep.subr.bf16.mxu0 0
        %545 = vmatpush1.bf16.msra.mxu0 0
        %546 = vmatprep.subr.bf16.mxu0 0
        %547 = vmatpush1.bf16.msra.mxu0 0
        %548 = vmatprep.subr.bf16.mxu0 0
        %549 = vmatpush1.bf16.msra.mxu0 0
        %550 = vmatprep.subr.bf16.mxu0 0
        %551 = vmatpush1.bf16.msra.mxu0 0
        %552 = vmatprep.subr.bf16.mxu0 0
        %553 = vmatpush1.bf16.msra.mxu0 0
        %554 = vmatprep.subr.bf16.mxu0 0
        %555 = vmatpush1.bf16.msra.mxu0 0
        %556 = vmatprep.subr.bf16.mxu0 0
        %557 = vmatpush1.bf16.msra.mxu0 0
        %558 = vmatprep.subr.bf16.mxu0 0
        %559 = vmatpush1.bf16.msra.mxu0 0
        %560 = vmatprep.subr.bf16.mxu0 0
        %561 = vmatpush1.bf16.msra.mxu0 0
        %562 = vmatprep.mubr.bf16.mxu0 0
        %563 = vmatmul.mubr.bf16.gmra.mrb[0].mxu0 %v382
        %v564 = vpop.f32.mrb[0].mxu0
        %v565 = vadd.f32 %v505, %v564
        %v566 = vpop.f32.mrb[0].mxu0
        %v567 = vpop.f32.mrb[0].mxu0
        %v568 = vadd.f32 %v505, %v567
        %v569 = vpop.f32.mrb[0].mxu0
        %570 = vmatprep.mubr.bf16.mxu0 0
        %571 = vmatmul.mubr.bf16.gmra.mrb[0].mxu0 %v385
        %v572 = vpop.f32.mrb[0].mxu0
        %v573 = vadd.f32 %v505, %v572
        %v574 = vpop.f32.mrb[0].mxu0
        %v575 = vpop.f32.mrb[0].mxu0
        %v576 = vadd.f32 %v505, %v575
        %v577 = vpop.f32.mrb[0].mxu0
        %578 = vmatprep.mubr.bf16.mxu0 0
        %579 = vmatmul.mubr.bf16.gmra.mrb[0].mxu0 %v388
        %v580 = vpop.f32.mrb[0].mxu0
        %v581 = vadd.f32 %v505, %v580
        %v582 = vpop.f32.mrb[0].mxu0
        %v583 = vpop.f32.mrb[0].mxu0
        %v584 = vadd.f32 %v505, %v583
        %v585 = vpop.f32.mrb[0].mxu0
        %586 = vmatprep.mubr.bf16.mxu0 0
        %587 = vmatmul.mubr.bf16.gmra.mrb[0].mxu0 %v391
        %v588 = vpop.f32.mrb[0].mxu0
        %v589 = vadd.f32 %v505, %v588
        %v590 = vpop.f32.mrb[0].mxu0
        %v591 = vpop.f32.mrb[0].mxu0
        %v592 = vadd.f32 %v505, %v591
        %v593 = vpop.f32.mrb[0].mxu0
        %594 = vmatprep.mubr.bf16.mxu0 0
        %595 = vmatmul.mubr.bf16.gmra.mrb[0].mxu0 %v394
        %v596 = vpop.f32.mrb[0].mxu0
        %v597 = vadd.f32 %v505, %v596
        %v598 = vpop.f32.mrb[0].mxu0
        %v599 = vpop.f32.mrb[0].mxu0
        %v600 = vadd.f32 %v505, %v599
        %v601 = vpop.f32.mrb[0].mxu0
        %602 = vmatprep.mubr.bf16.mxu0 0
        %603 = vmatmul.mubr.bf16.gmra.mrb[0].mxu0 %v397
        %v604 = vpop.f32.mrb[0].mxu0
        %v605 = vadd.f32 %v505, %v604
        %v606 = vpop.f32.mrb[0].mxu0
        %v607 = vpop.f32.mrb[0].mxu0
        %v608 = vadd.f32 %v505, %v607
        %v609 = vpop.f32.mrb[0].mxu0
        %610 = vmatprep.mubr.bf16.mxu0 0
        %611 = vmatmul.mubr.bf16.gmra.mrb[0].mxu0 %v400
        %v612 = vpop.f32.mrb[0].mxu0
        %v613 = vadd.f32 %v505, %v612
        %v614 = vpop.f32.mrb[0].mxu0
        %v615 = vpop.f32.mrb[0].mxu0
        %v616 = vadd.f32 %v505, %v615
        %v617 = vpop.f32.mrb[0].mxu0
        %618 = vmatprep.mubr.bf16.mxu0 0
        %619 = vmatmul.mubr.bf16.gmra.mrb[0].mxu0 %v403
        %v620 = vpop.f32.mrb[0].mxu0
        %v621 = vadd.f32 %v505, %v620
        %v622 = vpop.f32.mrb[0].mxu0
        %v623 = vpop.f32.mrb[0].mxu0
        %v624 = vadd.f32 %v505, %v623
        %v625 = vpop.f32.mrb[0].mxu0
        %626 = vdwg.mxu0
        %v627 = vld [vmem:[%s2] sm:$0xf]
        %v628 = vpack.c.bf16 %v443, %v440
        %v629 = vpack.c.bf16 %v451, %v448
        %v630 = vpack.c.bf16 %v459, %v456
        %v631 = vpack.c.bf16 %v467, %v464
        %v632 = vpack.c.bf16 %v475, %v472
        %v633 = vpack.c.bf16 %v483, %v480
        %v634 = vpack.c.bf16 %v491, %v488
        %v635 = vpack.c.bf16 %v499, %v496
        %636 = vmatprep.subr.bf16.mxu0 0
        %637 = vmatpush1.bf16.xpose.msra.mxu0 %v628
        %638 = vmatprep.subr.bf16.mxu0 0
        %639 = vmatpush1.bf16.xpose.msra.mxu0 %v629
        %640 = vmatprep.subr.bf16.mxu0 0
        %641 = vmatpush1.bf16.xpose.msra.mxu0 %v630
        %642 = vmatprep.subr.bf16.mxu0 0
        %643 = vmatpush1.bf16.xpose.msra.mxu0 %v631
        %644 = vmatprep.subr.bf16.mxu0 0
        %645 = vmatpush1.bf16.xpose.msra.mxu0 %v632
        %646 = vmatprep.subr.bf16.mxu0 0
        %647 = vmatpush1.bf16.xpose.msra.mxu0 %v633
        %648 = vmatprep.subr.bf16.mxu0 0
        %649 = vmatpush1.bf16.xpose.msra.mxu0 %v634
        %650 = vmatprep.subr.bf16.mxu0 0
        %651 = vmatpush1.bf16.xpose.msra.mxu0 %v635
        %652 = vmatprep.subr.bf16.mxu0 0
        %653 = vmatpush1.bf16.xpose.msra.mxu0 0
        %654 = vmatprep.subr.bf16.mxu0 0
        %655 = vmatpush1.bf16.xpose.msra.mxu0 0
        %656 = vmatprep.subr.bf16.mxu0 0
        %657 = vmatpush1.bf16.xpose.msra.mxu0 0
        %658 = vmatprep.subr.bf16.mxu0 0
        %659 = vmatpush1.bf16.xpose.msra.mxu0 0
        %660 = vmatprep.subr.bf16.mxu0 0
        %661 = vmatpush1.bf16.xpose.msra.mxu0 0
        %662 = vmatprep.subr.bf16.mxu0 0
        %663 = vmatpush1.bf16.xpose.msra.mxu0 0
        %664 = vmatprep.subr.bf16.mxu0 0
        %665 = vmatpush1.bf16.xpose.msra.mxu0 0
        %666 = vmatprep.subr.bf16.mxu0 0
        %667 = vmatpush1.bf16.xpose.msra.mxu0 0
        %668 = vmatprep.mubr.bf16.mxu0 0
        %669 = vmatmul.mubr.bf16.gmra.mrb[0].mxu0 %v627
        %v670 = vpop.f32.mrb[0].mxu0
        %v671 = vadd.f32 0.0, %v670
        %v672 = vpop.f32.mrb[0].mxu0
        %v673 = vpop.f32.mrb[0].mxu0
        %v674 = vpop.f32.mrb[0].mxu0
        %675 = vdwg.mxu0
        %v676 = vlaneseq
        %v677 = vand.u32 %v676, 127
        %s678 = smul.u32 %s21, 128
        %v679 = vstv %s678
        %v680 = vadd.s32 %v677, %v679
        %v681 = vstv %s279
        %vm682 = vcmp.lt.s32.totalorder %v680, %v681
        %v683 = vsel %vm682, %v671, -inf
        %v684 = vld [vmem:[#allocation2] sm:$0xff]
        %685 = vmax.xlane.f32.xlu0 %v683
        %v686 = vpop.xlane.xlu0 %685
        %v687 = vmax.f32 %v684, %v686
        %v688 = vsub.f32 %v684, %v687
        %v689 = vmul.f32 %v688, 1.442695
        %v690 = vpow.pop %v689
        %692 = vset.pattern.permute.xlu0 0
        %693 = vperm.xlu0 %692, %v687
        %v694 = vpop.permute.xlu0 %693
        %v696 = vsub.f32 %v683, %v694
        %v697 = vmul.f32 %v696, 1.442695
        %v698 = vpow.pop %v697
        %v699 = vld [vmem:[#allocation3] sm:$0xff]
        %v700 = vmul.f32 %v699, %v690
        %701 = vadd.xlane.f32.xlu0 %v698
        %v702 = vpop.xlane.xlu0 %701
        %v703 = vadd.f32 %v700, %v702
        %vm704 = vcmask 7168
        %705 = vst.msk [vmem:[#allocation3] sm:$0xff] %vm704, %v703
        %v706 = vld [vmem:[#allocation4] sm:$0xff]
        %708 = vset.pattern.permute.xlu0 0
        %709 = vperm.xlu0 %708, %v690
        %v710 = vpop.permute.xlu0 %709
        %v712 = vmul.f32 %v706, %v710
        %v713 = vpack.c.bf16 %v698, %v698
        %v714 = vpack.c.bf16 %v568, %v565
        %v715 = vpack.c.bf16 %v576, %v573
        %v716 = vpack.c.bf16 %v584, %v581
        %v717 = vpack.c.bf16 %v592, %v589
        %v718 = vpack.c.bf16 %v600, %v597
        %v719 = vpack.c.bf16 %v608, %v605
        %v720 = vpack.c.bf16 %v616, %v613
        %v721 = vpack.c.bf16 %v624, %v621
        %722 = vmatprep.subr.bf16.mxu0 0
        %723 = vmatpush1.bf16.msra.mxu0 %v714
        %724 = vmatprep.subr.bf16.mxu0 0
        %725 = vmatpush1.bf16.msra.mxu0 %v715
        %726 = vmatprep.subr.bf16.mxu0 0
        %727 = vmatpush1.bf16.msra.mxu0 %v716
        %728 = vmatprep.subr.bf16.mxu0 0
        %729 = vmatpush1.bf16.msra.mxu0 %v717
        %730 = vmatprep.subr.bf16.mxu0 0
        %731 = vmatpush1.bf16.msra.mxu0 %v718
        %732 = vmatprep.subr.bf16.mxu0 0
        %733 = vmatpush1.bf16.msra.mxu0 %v719
        %734 = vmatprep.subr.bf16.mxu0 0
        %735 = vmatpush1.bf16.msra.mxu0 %v720
        %736 = vmatprep.subr.bf16.mxu0 0
        %737 = vmatpush1.bf16.msra.mxu0 %v721
        %738 = vmatprep.subr.bf16.mxu0 0
        %739 = vmatpush1.bf16.msra.mxu0 0
        %740 = vmatprep.subr.bf16.mxu0 0
        %741 = vmatpush1.bf16.msra.mxu0 0
        %742 = vmatprep.subr.bf16.mxu0 0
        %743 = vmatpush1.bf16.msra.mxu0 0
        %744 = vmatprep.subr.bf16.mxu0 0
        %745 = vmatpush1.bf16.msra.mxu0 0
        %746 = vmatprep.subr.bf16.mxu0 0
        %747 = vmatpush1.bf16.msra.mxu0 0
        %748 = vmatprep.subr.bf16.mxu0 0
        %749 = vmatpush1.bf16.msra.mxu0 0
        %750 = vmatprep.subr.bf16.mxu0 0
        %751 = vmatpush1.bf16.msra.mxu0 0
        %752 = vmatprep.subr.bf16.mxu0 0
        %753 = vmatpush1.bf16.msra.mxu0 0
        %754 = vmatprep.mubr.bf16.mxu0 0
        %755 = vmatmul.mubr.bf16.gmra.mrb[0].mxu0 %v713
        %v756 = vpop.f32.mrb[0].mxu0
        %v757 = vadd.f32 0.0, %v756
        %v758 = vpop.f32.mrb[0].mxu0
        %v759 = vpop.f32.mrb[0].mxu0
        %v760 = vpop.f32.mrb[0].mxu0
        %761 = vdwg.mxu0
        %v762 = vadd.f32 %v712, %v757
        %763 = vst [vmem:[#allocation4] sm:$0xff] %v762
        %764 = vst.msk [vmem:[#allocation2] sm:$0xff] %vm704, %v687
        %p765 = scmp.eq.s32.totalorder %s21, 2
        // Predicated region
        $region53: #{tpu_custom_call.1} parent=47 // pred_check
          %p766 = pneg %p765
        $region54: #{tpu_custom_call.1} parent=47 // pred_check_branch
          %768 = sbr.rel (%p766) target = $region56
        $region55: #{tpu_custom_call.1} parent=47 // pred_region
          %v769 = vld [vmem:[%s7] sm:$0xff]
          %v770 = vld [vmem:[#allocation4] sm:$0xff]
          %v771 = vld [vmem:[#allocation3] sm:$0xff]
          %v772 = vrcp.pop %v771
          %774 = vset.pattern.permute.xlu0 0
          %775 = vperm.xlu0 %774, %v772
          %v776 = vpop.permute.xlu0 %775
          %v778 = vmul.f32 %v770, %v776
          %vm779 = vcmp.ge.s32.totalorder %v677, 0
          %vm780 = vcmp.lt.s32.totalorder %v677, 8
          %vm781 = vmand %vm779, %vm780
          %v782 = vsel %vm781, 1, 0
          %v783 = vcvt.s32.f32 %v782
          %v784 = vmul.f32 %v778, %v783
          %v785 = vadd.f32 %v784, 0.0
          %vm786 = vcmp.ge.s32.totalorder %v677, 8
          %vm787 = vcmp.lt.s32.totalorder %v677, 16
          %vm788 = vmand %vm786, %vm787
          %v789 = vsel %vm788, 1, 0
          %v790 = vcvt.s32.f32 %v789
          %v791 = vmul.f32 %v778, %v790
          %v793 = vrot.slane %v791, 2
          %v795 = vadd.f32 %v785, %v793
          %vm796 = vcmp.ge.s32.totalorder %v677, 16
          %vm797 = vcmp.lt.s32.totalorder %v677, 24
          %vm798 = vmand %vm796, %vm797
          %v799 = vsel %vm798, 1, 0
          %v800 = vcvt.s32.f32 %v799
          %v801 = vmul.f32 %v778, %v800
          %v803 = vrot.slane %v801, 4
          %v805 = vadd.f32 %v795, %v803
          %vm806 = vcmp.ge.s32.totalorder %v677, 24
          %vm807 = vcmp.lt.s32.totalorder %v677, 32
          %vm808 = vmand %vm806, %vm807
          %v809 = vsel %vm808, 1, 0
          %v810 = vcvt.s32.f32 %v809
          %v811 = vmul.f32 %v778, %v810
          %v813 = vrot.slane %v811, 6
          %v815 = vadd.f32 %v805, %v813
          %v816 = vld [vmem:[%s3] sm:$0x3]
          %v817 = vld [vmem:[%s4] sm:$0x3]
          %v818 = vld [vmem:[%s6] sm:$0xf]
          %v819 = vld [vmem:[%s6 + $0x4] sm:$0xf]
          %v820 = vld [vmem:[%s6 + $0x8] sm:$0xf]
          %v821 = vld [vmem:[%s6 + $0xc] sm:$0xf]
          %v822 = vld [vmem:[%s6 + $0x10] sm:$0xf]
          %v823 = vld [vmem:[%s6 + $0x14] sm:$0xf]
          %v824 = vld [vmem:[%s6 + $0x18] sm:$0xf]
          %v825 = vld [vmem:[%s6 + $0x1c] sm:$0xf]
          %v826 = vld [vmem:[%s6 + $0x20] sm:$0xf]
          %v827 = vld [vmem:[%s6 + $0x24] sm:$0xf]
          %v828 = vld [vmem:[%s6 + $0x28] sm:$0xf]
          %v829 = vld [vmem:[%s6 + $0x2c] sm:$0xf]
          %v830 = vld [vmem:[%s6 + $0x30] sm:$0xf]
          %v831 = vld [vmem:[%s6 + $0x34] sm:$0xf]
          %v832 = vld [vmem:[%s6 + $0x38] sm:$0xf]
          %v833 = vld [vmem:[%s6 + $0x3c] sm:$0xf]
          %v834 = vld [vmem:[%s6 + $0x40] sm:$0xf]
          %v835 = vld [vmem:[%s6 + $0x44] sm:$0xf]
          %v836 = vld [vmem:[%s6 + $0x48] sm:$0xf]
          %v837 = vld [vmem:[%s6 + $0x4c] sm:$0xf]
          %v838 = vld [vmem:[%s6 + $0x50] sm:$0xf]
          %v839 = vld [vmem:[%s6 + $0x54] sm:$0xf]
          %v840 = vld [vmem:[%s6 + $0x58] sm:$0xf]
          %v841 = vld [vmem:[%s6 + $0x5c] sm:$0xf]
          %v842 = vld [vmem:[%s6 + $0x60] sm:$0xf]
          %v843 = vld [vmem:[%s6 + $0x64] sm:$0xf]
          %v844 = vld [vmem:[%s6 + $0x68] sm:$0xf]
          %v845 = vld [vmem:[%s6 + $0x6c] sm:$0xf]
          %v846 = vld [vmem:[%s6 + $0x70] sm:$0xf]
          %v847 = vld [vmem:[%s6 + $0x74] sm:$0xf]
          %v848 = vld [vmem:[%s6 + $0x78] sm:$0xf]
          %v849 = vld [vmem:[%s6 + $0x7c] sm:$0xf]
          %v850 = vpack.c.bf16 %v815, %v815
          %v851 = vlaneseq
          %v852 = vshrl.u32 %v851, 7
          %v853 = vsub.s32 2, %v852
          %v854 = vrot.slane %v769, %v853
          %v871 = vunpack.c.l.b16 %v818
          %v872 = vunpack.c.l.b16 %v819
          %v873 = vunpack.c.l.b16 %v820
          %v874 = vunpack.c.l.b16 %v821
          %v875 = vunpack.c.l.b16 %v822
          %v876 = vunpack.c.l.b16 %v823
          %v877 = vunpack.c.l.b16 %v824
          %v878 = vunpack.c.l.b16 %v825
          %v879 = vunpack.c.l.b16 %v826
          %v880 = vunpack.c.l.b16 %v827
          %v881 = vunpack.c.l.b16 %v828
          %v882 = vunpack.c.l.b16 %v829
          %v883 = vunpack.c.l.b16 %v830
          %v884 = vunpack.c.l.b16 %v831
          %v885 = vunpack.c.l.b16 %v832
          %v886 = vunpack.c.l.b16 %v833
          %v887 = vpack.c.b16 %v872, %v871
          %v888 = vpack.c.b16 %v874, %v873
          %v889 = vpack.c.b16 %v876, %v875
          %v890 = vpack.c.b16 %v878, %v877
          %v891 = vpack.c.b16 %v880, %v879
          %v892 = vpack.c.b16 %v882, %v881
          %v893 = vpack.c.b16 %v884, %v883
          %v894 = vpack.c.b16 %v886, %v885
          %903 = vmatprep.subr.bf16.mxu0 0
          %904 = vmatpush1.bf16.msra.mxu0 %v887
          %905 = vmatprep.subr.bf16.mxu0 0
          %906 = vmatpush1.bf16.msra.mxu0 %v888
          %907 = vmatprep.subr.bf16.mxu0 0
          %908 = vmatpush1.bf16.msra.mxu0 %v889
          %909 = vmatprep.subr.bf16.mxu0 0
          %910 = vmatpush1.bf16.msra.mxu0 %v890
          %911 = vmatprep.subr.bf16.mxu0 0
          %912 = vmatpush1.bf16.msra.mxu0 %v891
          %913 = vmatprep.subr.bf16.mxu0 0
          %914 = vmatpush1.bf16.msra.mxu0 %v892
          %915 = vmatprep.subr.bf16.mxu0 0
          %916 = vmatpush1.bf16.msra.mxu0 %v893
          %917 = vmatprep.subr.bf16.mxu0 0
          %918 = vmatpush1.bf16.msra.mxu0 %v894
          %919 = vmatprep.subr.bf16.mxu0 0
          %920 = vmatpush1.bf16.msra.mxu0 0
          %921 = vmatprep.subr.bf16.mxu0 0
          %922 = vmatpush1.bf16.msra.mxu0 0
          %923 = vmatprep.subr.bf16.mxu0 0
          %924 = vmatpush1.bf16.msra.mxu0 0
          %925 = vmatprep.subr.bf16.mxu0 0
          %926 = vmatpush1.bf16.msra.mxu0 0
          %927 = vmatprep.subr.bf16.mxu0 0
          %928 = vmatpush1.bf16.msra.mxu0 0
          %929 = vmatprep.subr.bf16.mxu0 0
          %930 = vmatpush1.bf16.msra.mxu0 0
          %931 = vmatprep.subr.bf16.mxu0 0
          %932 = vmatpush1.bf16.msra.mxu0 0
          %933 = vmatprep.subr.bf16.mxu0 0
          %934 = vmatpush1.bf16.msra.mxu0 0
          %935 = vmatprep.mubr.bf16.mxu0 0
          %936 = vmatmul.mubr.bf16.gmra.mrb[0].mxu0 %v850
          %v937 = vpop.f32.mrb[0].mxu0
          %v938 = vadd.f32 %v854, %v937
          %v939 = vpop.f32.mrb[0].mxu0
          %v940 = vpop.f32.mrb[0].mxu0
          %v941 = vpop.f32.mrb[0].mxu0
          %942 = vdwg.mxu0
          %v943 = vadd.f32 %v816, %v938
          %vm944 = vcmask 1041408
          %v945 = vsel %vm944, %v943, 0.0
          %946 = vadd.xlane.f32.xlu0 %v945
          %v947 = vpop.xlane.xlu0 %946
          %v948 = vmul.f32 %v943, %v943
          %v949 = vsel %vm944, %v948, 0.0
          %950 = vadd.xlane.f32.xlu0 %v949
          %v951 = vpop.xlane.xlu0 %950
          %v952 = vmul.f32 %v947, 0.03125
          %v953 = vmul.f32 %v951, 0.03125
          %v954 = vmul.f32 %v952, %v952
          %v955 = vsub.f32 %v953, %v954
          %v956 = vmax.f32 %v955, 0.0
          %v957 = vsub.f32 %v943, %v952
          %v958 = vadd.f32 %v956, 1e-05
          %v959 = vrsqrt.pop %v958
          %v960 = vmul.f32 %v957, %v959
          %v961 = vlaneseq
          %v962 = vshrl.u32 %v961, 7
          %v963 = vsub.s32 3, %v962
          %v964 = vrot.slane %v769, %v963
          %v965 = vmul.f32 %v960, %v964
          %v966 = vlaneseq
          %v967 = vshrl.u32 %v966, 7
          %v968 = vsub.s32 4, %v967
          %v969 = vrot.slane %v769, %v968
          %v970 = vadd.f32 %v965, %v969
          %v971 = vpack.c.bf16 %v970, %v970
          %v972 = vlaneseq
          %v973 = vshrl.u32 %v972, 7
          %v974 = vsub.s32 5, %v973
          %v975 = vrot.slane %v769, %v974
          %v992 = vunpack.c.l.b16 %v834
          %v993 = vunpack.c.l.b16 %v835
          %v994 = vunpack.c.l.b16 %v836
          %v995 = vunpack.c.l.b16 %v837
          %v996 = vunpack.c.l.b16 %v838
          %v997 = vunpack.c.l.b16 %v839
          %v998 = vunpack.c.l.b16 %v840
          %v999 = vunpack.c.l.b16 %v841
          %v1000 = vunpack.c.l.b16 %v842
          %v1001 = vunpack.c.l.b16 %v843
          %v1002 = vunpack.c.l.b16 %v844
          %v1003 = vunpack.c.l.b16 %v845
          %v1004 = vunpack.c.l.b16 %v846
          %v1005 = vunpack.c.l.b16 %v847
          %v1006 = vunpack.c.l.b16 %v848
          %v1007 = vunpack.c.l.b16 %v849
          %v1008 = vpack.c.b16 %v993, %v992
          %v1009 = vpack.c.b16 %v995, %v994
          %v1010 = vpack.c.b16 %v997, %v996
          %v1011 = vpack.c.b16 %v999, %v998
          %v1012 = vpack.c.b16 %v1001, %v1000
          %v1013 = vpack.c.b16 %v1003, %v1002
          %v1014 = vpack.c.b16 %v1005, %v1004
          %v1015 = vpack.c.b16 %v1007, %v1006
          %1024 = vmatprep.subr.bf16.mxu0 0
          %1025 = vmatpush1.bf16.msra.mxu0 %v1008
          %1026 = vmatprep.subr.bf16.mxu0 0
          %1027 = vmatpush1.bf16.msra.mxu0 %v1009
          %1028 = vmatprep.subr.bf16.mxu0 0
          %1029 = vmatpush1.bf16.msra.mxu0 %v1010
          %1030 = vmatprep.subr.bf16.mxu0 0
          %1031 = vmatpush1.bf16.msra.mxu0 %v1011
          %1032 = vmatprep.subr.bf16.mxu0 0
          %1033 = vmatpush1.bf16.msra.mxu0 %v1012
          %1034 = vmatprep.subr.bf16.mxu0 0
          %1035 = vmatpush1.bf16.msra.mxu0 %v1013
          %1036 = vmatprep.subr.bf16.mxu0 0
          %1037 = vmatpush1.bf16.msra.mxu0 %v1014
          %1038 = vmatprep.subr.bf16.mxu0 0
          %1039 = vmatpush1.bf16.msra.mxu0 %v1015
          %1040 = vmatprep.subr.bf16.mxu0 0
          %1041 = vmatpush1.bf16.msra.mxu0 0
          %1042 = vmatprep.subr.bf16.mxu0 0
          %1043 = vmatpush1.bf16.msra.mxu0 0
          %1044 = vmatprep.subr.bf16.mxu0 0
          %1045 = vmatpush1.bf16.msra.mxu0 0
          %1046 = vmatprep.subr.bf16.mxu0 0
          %1047 = vmatpush1.bf16.msra.mxu0 0
          %1048 = vmatprep.subr.bf16.mxu0 0
          %1049 = vmatpush1.bf16.msra.mxu0 0
          %1050 = vmatprep.subr.bf16.mxu0 0
          %1051 = vmatpush1.bf16.msra.mxu0 0
          %1052 = vmatprep.subr.bf16.mxu0 0
          %1053 = vmatpush1.bf16.msra.mxu0 0
          %1054 = vmatprep.subr.bf16.mxu0 0
          %1055 = vmatpush1.bf16.msra.mxu0 0
          %1056 = vmatprep.mubr.bf16.mxu0 0
          %1057 = vmatmul.mubr.bf16.gmra.mrb[0].mxu0 %v971
          %v1058 = vpop.f32.mrb[0].mxu0
          %v1059 = vadd.f32 %v975, %v1058
          %v1060 = vpop.f32.mrb[0].mxu0
          %v1061 = vpop.f32.mrb[0].mxu0
          %v1062 = vpop.f32.mrb[0].mxu0
          %1063 = vdwg.mxu0
          %v1064 = vmax.f32 %v1059, 0.0
          %v1065 = vadd.f32 %v970, %v1064
          %v1066 = vsel %vm944, %v1065, 0.0
          %1067 = vadd.xlane.f32.xlu0 %v1066
          %v1068 = vpop.xlane.xlu0 %1067
          %v1069 = vmul.f32 %v1065, %v1065
          %v1070 = vsel %vm944, %v1069, 0.0
          %1071 = vadd.xlane.f32.xlu0 %v1070
          %v1072 = vpop.xlane.xlu0 %1071
          %v1073 = vmul.f32 %v1068, 0.03125
          %v1074 = vmul.f32 %v1072, 0.03125
          %v1075 = vmul.f32 %v1073, %v1073
          %v1076 = vsub.f32 %v1074, %v1075
          %v1077 = vmax.f32 %v1076, 0.0
          %v1078 = vsub.f32 %v1065, %v1073
          %v1079 = vadd.f32 %v1077, 1e-05
          %v1080 = vrsqrt.pop %v1079
          %v1081 = vmul.f32 %v1078, %v1080
          %v1082 = vlaneseq
          %v1083 = vshrl.u32 %v1082, 7
          %v1084 = vsub.s32 6, %v1083
          %v1085 = vrot.slane %v769, %v1084
          %v1086 = vmul.f32 %v1081, %v1085
          %v1087 = vlaneseq
          %v1088 = vshrl.u32 %v1087, 7
          %v1089 = vsub.s32 7, %v1088
          %v1090 = vrot.slane %v769, %v1089
          %v1091 = vadd.f32 %v1086, %v1090
          %v1092 = vmul.f32 %v1091, %v817
          %1093 = vst [vmem:[#allocation7] sm:$0x3] %v1092
        $region56: #{tpu_custom_call.1} parent=47 // pred_fallthru
          _
        // Predicated region
        $region57: #{tpu_custom_call.1} parent=47 // pred_check
          %p1094 = pneg %p186
        $region58: #{tpu_custom_call.1} parent=47 // pred_check_branch
          %1096 = sbr.rel (%p1094) target = $region60
        $region59: #{tpu_custom_call.1} parent=47 // pred_region
          %s1098 = ssub.s32 32, 32
          %1099 = vsyncadd [#allocation8], %s1098
          %s1101 = sshll.u32 [#allocation7], 4
          %s1102 = int_to_ptr.vmem [resolvable:$true] %s1101
          %1104 = dma.vmem_to_hbm [thread:$0]  %s1102, 32, %s8, [#allocation8]
        $region60: #{tpu_custom_call.1} parent=47 // pred_fallthru
          _
        // Predicated region
        $region61: #{tpu_custom_call.1} parent=47 // pred_check
          %p1105 = pneg %p186
        $region62: #{tpu_custom_call.1} parent=47 // pred_check_branch
          %1107 = sbr.rel (%p1105) target = $region64
        $region63: #{tpu_custom_call.1} parent=47 // pred_region
          %1108 = dma.done [#allocation8], 32
        $region64: #{tpu_custom_call.1} parent=47 // pred_fallthru
          _
      $region48: #{tpu_custom_call.1} parent=5 // pred_fallthru
        _
      %p1109 = scmp.le.s32.totalorder 2, %s16
      // Predicated region
      $region65: #{tpu_custom_call.1} parent=5 // pred_check
        %p1110 = pneg %p1109
      $region66: #{tpu_custom_call.1} parent=5 // pred_check_branch
        %1112 = sbr.rel (%p1110) target = $region68
      $region67: #{tpu_custom_call.1} parent=5 // pred_region
        %s1113 = ssub.s32 %s16, 2
      $region68: #{tpu_custom_call.1} parent=5 // pred_fallthru
        _
    $region6: #{tpu_custom_call.1} parent=1 // loop_footer
      %s20 = sadd.s32 1, %s16
    $region7: #{tpu_custom_call.1} parent=1 // loop_footer_branch
      %15 = sbr.rel target = $region3
    $region8: #{tpu_custom_call.1} parent=1 // loop_exit
      _
    %1114 = vsyncpa [#allocation8], 1
    %s1115 = scalar_lea.sflag [#allocation8], 1
    %1116 = vsyncpa %s1115, 1

</llo_original>
